<compile_context>
chip_gen: v5e
topology: v5e:2x2
jax: 0.10.0
libtpu: 0.0.40
codegen_flags: <defaults>
</compile_context>

<pallas_src>
import jax
import jax.numpy as jnp
from jax import lax
from jax.experimental import pallas as pl
from jax.experimental.pallas import tpu as pltpu

N_FEATURES = 4
SEQ_LEN = 8
N_HIDDEN = 20
BATCH = 2

GATE_PAD = 128            # one 128-lane block per gate
GATE_ORDER = (0, 1, 3, 2)  # PyTorch order is [i, f, g, o]; we use [i, f, o, g]


def mv_lstm_kernel(x_ref, wih_ref, whh_ref, b_ref, wlin_ref, blin_ref,
                   out_ref, pre_ref):
    # x_ref:    (T*Bp, F)        time-major, batch-padded, flattened
    # wih_ref:  (F, 4*GP)        gate-blocked [i|f|o|g], zero-padded columns
    # whh_ref:  (H, 4*GP)
    # b_ref:    (1, 4*GP)        b_ih + b_hh, gate-blocked
    # wlin_ref: (T, H)           final Linear weight reshaped per time step
    # blin_ref: (1, 1)
    # out_ref:  (Bp, 1)
    # pre_ref:  (T*Bp, 4*GP)     VMEM scratch for the hoisted input projection
    TB, F = x_ref.shape
    H = whh_ref.shape[0]
    GP = whh_ref.shape[1] // 4
    T = wlin_ref.shape[0]
    Bp = TB // T

    # --- hoisted input projection + bias: one MXU pass for all T*Bp rows ----
    pre_ref[...] = (jnp.dot(x_ref[...], wih_ref[...],
                            preferred_element_type=jnp.float32)
                    + b_ref[...])

    whh = whh_ref[...]          # (H, 4*GP), loop-invariant
    wlin = wlin_ref[...]        # (T, H),    loop-invariant

    h = jnp.zeros((Bp, H), jnp.float32)
    c = jnp.zeros((Bp, H), jnp.float32)
    lin = jnp.zeros((Bp, H), jnp.float32)   # running Linear partial (elementwise)

    # Fully unrolled recurrence (T is small and static): static slices everywhere,
    # full scheduler visibility across the serial dependency chain.
    for t in range(T):
        gates = (pre_ref[t * Bp:(t + 1) * Bp, :]
                 + jnp.dot(h, whh, preferred_element_type=jnp.float32))  # (Bp, 4*GP)
        # [i | f | o] occupy the first three 128-lane blocks -> one sigmoid call;
        # every gate slice starts at a lane-block boundary (no rotations).
        sig = jax.nn.sigmoid(gates[:, :3 * GP])
        i_g = sig[:, 0 * GP:0 * GP + H]
        f_g = sig[:, 1 * GP:1 * GP + H]
        o_g = sig[:, 2 * GP:2 * GP + H]
        g_g = jnp.tanh(gates[:, 3 * GP:3 * GP + H])
        c = f_g * c + i_g * g_g
        h = o_g * jnp.tanh(c)
        # Final Linear: elementwise accumulate on a side chain (static wlin slice);
        # the single cross-lane reduction is deferred to after the loop.
        lin = lin + h * wlin[t:t + 1, :]

    out_ref[...] = jnp.sum(lin, axis=1, keepdims=True) + blin_ref[...]


def _prep_gate_matrix(w, H):
    """w: (4H, K) PyTorch LSTM weight (rows [i,f,g,o]) -> (K, 4*GATE_PAD),
    transposed, reordered to [i,f,o,g], each gate in its own 128-lane block."""
    K = w.shape[1]
    w_t = w.T.astype(jnp.float32)                       # (K, 4H)
    out = jnp.zeros((K, 4 * GATE_PAD), jnp.float32)
    for gi, og in enumerate(GATE_ORDER):
        out = out.at[:, gi * GATE_PAD:gi * GATE_PAD + H].set(
            w_t[:, og * H:(og + 1) * H])
    return out


def _prep_gate_bias(b, H):
    """b: (4H,) combined bias -> (1, 4*GATE_PAD) gate-blocked, reordered."""
    b = b.astype(jnp.float32)
    out = jnp.zeros((1, 4 * GATE_PAD), jnp.float32)
    for gi, og in enumerate(GATE_ORDER):
        out = out.at[0, gi * GATE_PAD:gi * GATE_PAD + H].set(
            b[og * H:(og + 1) * H])
    return out


def mv_lstm_forward(x, params):
    """x: (B, T, F) float32 (batch_first, like the PyTorch module). Returns (B, 1)."""
    w_ih, w_hh, b_ih, b_hh, w_lin, b_lin = params
    B, T, F = x.shape
    H = w_hh.shape[1]
    GP = GATE_PAD
    Bp = max(8, ((B + 7) // 8) * 8)          # pad batch to a sublane multiple

    # time-major, batch-padded, flattened so the input projection is ONE matmul
    x_p = jnp.zeros((Bp, T, F), jnp.float32).at[:B].set(x.astype(jnp.float32))
    x_tb = jnp.transpose(x_p, (1, 0, 2)).reshape(T * Bp, F)

    wih_p = _prep_ate = _prep_gate_matrix(w_ih, H)       # (F, 4*GP)
    whh_p = _prep_gate_matrix(w_hh, H)                   # (H, 4*GP)
    b_p = _prep_gate_bias(b_ih + b_hh, H)                # (1, 4*GP)
    wlin = w_lin.reshape(T, H).astype(jnp.float32)       # (T, H)
    blin = b_lin.reshape(1, 1).astype(jnp.float32)       # (1, 1)

    vmem = pl.BlockSpec(memory_space=pltpu.MemorySpace.VMEM)
    out = pl.pallas_call(
        mv_lstm_kernel,
        out_shape=jax.ShapeDtypeStruct((Bp, 1), jnp.float32),
        in_specs=[vmem] * 6,
        out_specs=vmem,
        scratch_shapes=[pltpu.VMEM((T * Bp, 4 * GP), jnp.float32)],
    )(x_tb, wih_p, whh_p, b_p, wlin, blin)
    return out[:B]


def mv_lstm_reference(x, params):
    """Pure-JAX reference matching torch.nn.LSTM + Linear semantics."""
    w_ih, w_hh, b_ih, b_hh, w_lin, b_lin = params
    B, T, F = x.shape
    H = w_hh.shape[1]
    h0 = jnp.zeros((B, H), jnp.float32)
    c0 = jnp.zeros((B, H), jnp.float32)

    def step(carry, x_t):
        h, c = carry
        gates = x_t @ w_ih.T + b_ih + h @ w_hh.T + b_hh
        i_g = jax.nn.sigmoid(gates[:, 0 * H:1 * H])
        f_g = jax.nn.sigmoid(gates[:, 1 * H:2 * H])
        g_g = jnp.tanh(gates[:, 2 * H:3 * H])
        o_g = jax.nn.sigmoid(gates[:, 3 * H:4 * H])
        c_new = f_g * c + i_g * g_g
        h_new = o_g * jnp.tanh(c_new)
        return (h_new, c_new), h_new

    _, hs = lax.scan(step, (h0, c0), jnp.transpose(x, (1, 0, 2)))  # (T, B, H)
    lstm_out = jnp.transpose(hs, (1, 0, 2))                        # (B, T, H)
    flat = lstm_out.reshape(B, T * H)
    return flat @ w_lin.T + b_lin


def init_params(key, n_features, seq_len, n_hidden):
    # Deterministic init mimicking PyTorch's uniform(-1/sqrt(H)) scheme.
    k_lstm = 1.0 / jnp.sqrt(jnp.float32(n_hidden))
    k_lin = 1.0 / jnp.sqrt(jnp.float32(n_hidden * seq_len))
    ks = jax.random.split(key, 6)
    w_ih = jax.random.uniform(ks[0], (4 * n_hidden, n_features), jnp.float32, -k_lstm, k_lstm)
    w_hh = jax.random.uniform(ks[1], (4 * n_hidden, n_hidden), jnp.float32, -k_lstm, k_lstm)
    b_ih = jax.random.uniform(ks[2], (4 * n_hidden,), jnp.float32, -k_lstm, k_lstm)
    b_hh = jax.random.uniform(ks[3], (4 * n_hidden,), jnp.float32, -k_lstm, k_lstm)
    w_lin = jax.random.uniform(ks[4], (1, n_hidden * seq_len), jnp.float32, -k_lin, k_lin)
    b_lin = jax.random.uniform(ks[5], (1,), jnp.float32, -k_lin, k_lin)
    return (w_ih, w_hh, b_ih, b_hh, w_lin, b_lin)


if __name__ == "__main__":
    key = jax.random.PRNGKey(0)
    kx, kp = jax.random.split(key)
    x = jax.random.normal(kx, (BATCH, SEQ_LEN, N_FEATURES), jnp.float32)
    params = init_params(kp, N_FEATURES, SEQ_LEN, N_HIDDEN)

    out = jax.block_until_ready(mv_lstm_forward(x, params))
    ref = jax.block_until_ready(mv_lstm_reference(x, params))

    assert out.shape == (BATCH, 1)
    assert jnp.allclose(out, ref, rtol=1e-3, atol=1e-3), (out, ref)
    print("KERNEL_OK")
</pallas_src>

<mosaic_0001>
module attributes {stable_mosaic.version = 11 : i64} {
  func.func @mv_lstm_kernel(%arg0: memref<64x4xf32, #tpu.memory_space<vmem>>, %arg1: memref<4x512xf32, #tpu.memory_space<vmem>>, %arg2: memref<20x512xf32, #tpu.memory_space<vmem>>, %arg3: memref<1x512xf32, #tpu.memory_space<vmem>>, %arg4: memref<8x20xf32, #tpu.memory_space<vmem>>, %arg5: memref<1x1xf32, #tpu.memory_space<vmem>>, %arg6: memref<8x1xf32, #tpu.memory_space<vmem>>, %arg7: memref<64x512xf32, #tpu.memory_space<vmem>>) attributes {dimension_semantics = [], scalar_prefetch = 0 : i64, scratch_operands = 1 : i64, tpu.core_type = #tpu.core_type<tc>} {
    %c0 = arith.constant 0 : index
    %c0_0 = arith.constant 0 : index
    %0 = vector.load %arg0[%c0, %c0_0] : memref<64x4xf32, #tpu.memory_space<vmem>>, vector<64x4xf32>
    %c0_1 = arith.constant 0 : index
    %c0_2 = arith.constant 0 : index
    %1 = vector.load %arg1[%c0_1, %c0_2] : memref<4x512xf32, #tpu.memory_space<vmem>>, vector<4x512xf32>
    %cst = arith.constant dense<0.000000e+00> : vector<64x512xf32>
    %2 = tpu.matmul %0, %1, %cst {dimension_numbers = #tpu.dot_dimension_numbers<[1], [0], [0], [1], [0, 0, 1, 1], [], []>} : vector<64x4xf32>, vector<4x512xf32>, vector<64x512xf32> -> vector<64x512xf32>
    %c0_3 = arith.constant 0 : index
    %c0_4 = arith.constant 0 : index
    %3 = vector.load %arg3[%c0_3, %c0_4] : memref<1x512xf32, #tpu.memory_space<vmem>>, vector<1x512xf32>
    %4 = vector.broadcast %3 : vector<1x512xf32> to vector<64x512xf32>
    %5 = arith.addf %2, %4 : vector<64x512xf32>
    %c0_5 = arith.constant 0 : index
    %c0_6 = arith.constant 0 : index
    %6 = vector.load %arg7[%c0_5, %c0_6] : memref<64x512xf32, #tpu.memory_space<vmem>>, vector<64x512xf32>
    tpu.vector_store %arg7[%c0_5, %c0_6], %5 {strides = array<i32>} : memref<64x512xf32, #tpu.memory_space<vmem>>, vector<64x512xf32>,
    %c0_7 = arith.constant 0 : index
    %c0_8 = arith.constant 0 : index
    %7 = vector.load %arg2[%c0_7, %c0_8] : memref<20x512xf32, #tpu.memory_space<vmem>>, vector<20x512xf32>
    %c0_9 = arith.constant 0 : index
    %c0_10 = arith.constant 0 : index
    %8 = vector.load %arg4[%c0_9, %c0_10] : memref<8x20xf32, #tpu.memory_space<vmem>>, vector<8x20xf32>
    %cst_11 = arith.constant 0.000000e+00 : f32
    %9 = vector.broadcast %cst_11 : f32 to vector<8x20xf32>
    %cst_12 = arith.constant 0.000000e+00 : f32
    %10 = vector.broadcast %cst_12 : f32 to vector<8x20xf32>
    %cst_13 = arith.constant 0.000000e+00 : f32
    %11 = vector.broadcast %cst_13 : f32 to vector<8x20xf32>
    %c0_14 = arith.constant 0 : index
    %c0_15 = arith.constant 0 : index
    %12 = vector.load %arg7[%c0_14, %c0_15] : memref<64x512xf32, #tpu.memory_space<vmem>>, vector<8x512xf32>
    %cst_16 = arith.constant dense<0.000000e+00> : vector<8x512xf32>
    %13 = tpu.matmul %9, %7, %cst_16 {dimension_numbers = #tpu.dot_dimension_numbers<[1], [0], [0], [1], [0, 0, 1, 1], [], []>} : vector<8x20xf32>, vector<20x512xf32>, vector<8x512xf32> -> vector<8x512xf32>
    %14 = arith.addf %12, %13 : vector<8x512xf32>
    %15 = vector.extract_strided_slice %14 {offsets = [0, 0], sizes = [8, 384], strides = [1, 1]} : vector<8x512xf32> to vector<8x384xf32>
    %16 = arith.negf %15 : vector<8x384xf32>
    %17 = math.exp %16 : vector<8x384xf32>
    %cst_17 = arith.constant 1.000000e+00 : f32
    %18 = vector.broadcast %cst_17 : f32 to vector<8x384xf32>
    %19 = arith.addf %18, %17 : vector<8x384xf32>
    %20 = arith.divf %18, %19 : vector<8x384xf32>
    %21 = vector.extract_strided_slice %20 {offsets = [0, 0], sizes = [8, 20], strides = [1, 1]} : vector<8x384xf32> to vector<8x20xf32>
    %22 = vector.extract_strided_slice %20 {offsets = [0, 128], sizes = [8, 20], strides = [1, 1]} : vector<8x384xf32> to vector<8x20xf32>
    %23 = vector.extract_strided_slice %20 {offsets = [0, 256], sizes = [8, 20], strides = [1, 1]} : vector<8x384xf32> to vector<8x20xf32>
    %24 = vector.extract_strided_slice %14 {offsets = [0, 384], sizes = [8, 20], strides = [1, 1]} : vector<8x512xf32> to vector<8x20xf32>
    %25 = math.tanh %24 : vector<8x20xf32>
    %26 = arith.mulf %22, %10 : vector<8x20xf32>
    %27 = arith.mulf %21, %25 : vector<8x20xf32>
    %28 = arith.addf %26, %27 : vector<8x20xf32>
    %29 = math.tanh %28 : vector<8x20xf32>
    %30 = arith.mulf %23, %29 : vector<8x20xf32>
    %31 = vector.extract_strided_slice %8 {offsets = [0, 0], sizes = [1, 20], strides = [1, 1]} : vector<8x20xf32> to vector<1x20xf32>
    %32 = vector.broadcast %31 : vector<1x20xf32> to vector<8x20xf32>
    %33 = arith.mulf %30, %32 : vector<8x20xf32>
    %34 = arith.addf %11, %33 : vector<8x20xf32>
    %c8 = arith.constant 8 : index
    %c0_18 = arith.constant 0 : index
    %35 = vector.load %arg7[%c8, %c0_18] : memref<64x512xf32, #tpu.memory_space<vmem>>, vector<8x512xf32>
    %cst_19 = arith.constant dense<0.000000e+00> : vector<8x512xf32>
    %36 = tpu.matmul %30, %7, %cst_19 {dimension_numbers = #tpu.dot_dimension_numbers<[1], [0], [0], [1], [0, 0, 1, 1], [], []>} : vector<8x20xf32>, vector<20x512xf32>, vector<8x512xf32> -> vector<8x512xf32>
    %37 = arith.addf %35, %36 : vector<8x512xf32>
    %38 = vector.extract_strided_slice %37 {offsets = [0, 0], sizes = [8, 384], strides = [1, 1]} : vector<8x512xf32> to vector<8x384xf32>
    %39 = arith.negf %38 : vector<8x384xf32>
    %40 = math.exp %39 : vector<8x384xf32>
    %cst_20 = arith.constant 1.000000e+00 : f32
    %41 = vector.broadcast %cst_20 : f32 to vector<8x384xf32>
    %42 = arith.addf %41, %40 : vector<8x384xf32>
    %43 = arith.divf %41, %42 : vector<8x384xf32>
    %44 = vector.extract_strided_slice %43 {offsets = [0, 0], sizes = [8, 20], strides = [1, 1]} : vector<8x384xf32> to vector<8x20xf32>
    %45 = vector.extract_strided_slice %43 {offsets = [0, 128], sizes = [8, 20], strides = [1, 1]} : vector<8x384xf32> to vector<8x20xf32>
    %46 = vector.extract_strided_slice %43 {offsets = [0, 256], sizes = [8, 20], strides = [1, 1]} : vector<8x384xf32> to vector<8x20xf32>
    %47 = vector.extract_strided_slice %37 {offsets = [0, 384], sizes = [8, 20], strides = [1, 1]} : vector<8x512xf32> to vector<8x20xf32>
    %48 = math.tanh %47 : vector<8x20xf32>
    %49 = arith.mulf %45, %28 : vector<8x20xf32>
    %50 = arith.mulf %44, %48 : vector<8x20xf32>
    %51 = arith.addf %49, %50 : vector<8x20xf32>
    %52 = math.tanh %51 : vector<8x20xf32>
    %53 = arith.mulf %46, %52 : vector<8x20xf32>
    %54 = vector.extract_strided_slice %8 {offsets = [1, 0], sizes = [1, 20], strides = [1, 1]} : vector<8x20xf32> to vector<1x20xf32>
    %55 = vector.broadcast %54 : vector<1x20xf32> to vector<8x20xf32>
    %56 = arith.mulf %53, %55 : vector<8x20xf32>
    %57 = arith.addf %34, %56 : vector<8x20xf32>
    %c16 = arith.constant 16 : index
    %c0_21 = arith.constant 0 : index
    %58 = vector.load %arg7[%c16, %c0_21] : memref<64x512xf32, #tpu.memory_space<vmem>>, vector<8x512xf32>
    %cst_22 = arith.constant dense<0.000000e+00> : vector<8x512xf32>
    %59 = tpu.matmul %53, %7, %cst_22 {dimension_numbers = #tpu.dot_dimension_numbers<[1], [0], [0], [1], [0, 0, 1, 1], [], []>} : vector<8x20xf32>, vector<20x512xf32>, vector<8x512xf32> -> vector<8x512xf32>
    %60 = arith.addf %58, %59 : vector<8x512xf32>
    %61 = vector.extract_strided_slice %60 {offsets = [0, 0], sizes = [8, 384], strides = [1, 1]} : vector<8x512xf32> to vector<8x384xf32>
    %62 = arith.negf %61 : vector<8x384xf32>
    %63 = math.exp %62 : vector<8x384xf32>
    %cst_23 = arith.constant 1.000000e+00 : f32
    %64 = vector.broadcast %cst_23 : f32 to vector<8x384xf32>
    %65 = arith.addf %64, %63 : vector<8x384xf32>
    %66 = arith.divf %64, %65 : vector<8x384xf32>
    %67 = vector.extract_strided_slice %66 {offsets = [0, 0], sizes = [8, 20], strides = [1, 1]} : vector<8x384xf32> to vector<8x20xf32>
    %68 = vector.extract_strided_slice %66 {offsets = [0, 128], sizes = [8, 20], strides = [1, 1]} : vector<8x384xf32> to vector<8x20xf32>
    %69 = vector.extract_strided_slice %66 {offsets = [0, 256], sizes = [8, 20], strides = [1, 1]} : vector<8x384xf32> to vector<8x20xf32>
    %70 = vector.extract_strided_slice %60 {offsets = [0, 384], sizes = [8, 20], strides = [1, 1]} : vector<8x512xf32> to vector<8x20xf32>
    %71 = math.tanh %70 : vector<8x20xf32>
    %72 = arith.mulf %68, %51 : vector<8x20xf32>
    %73 = arith.mulf %67, %71 : vector<8x20xf32>
    %74 = arith.addf %72, %73 : vector<8x20xf32>
    %75 = math.tanh %74 : vector<8x20xf32>
    %76 = arith.mulf %69, %75 : vector<8x20xf32>
    %77 = vector.extract_strided_slice %8 {offsets = [2, 0], sizes = [1, 20], strides = [1, 1]} : vector<8x20xf32> to vector<1x20xf32>
    %78 = vector.broadcast %77 : vector<1x20xf32> to vector<8x20xf32>
    %79 = arith.mulf %76, %78 : vector<8x20xf32>
    %80 = arith.addf %57, %79 : vector<8x20xf32>
    %c24 = arith.constant 24 : index
    %c0_24 = arith.constant 0 : index
    %81 = vector.load %arg7[%c24, %c0_24] : memref<64x512xf32, #tpu.memory_space<vmem>>, vector<8x512xf32>
    %cst_25 = arith.constant dense<0.000000e+00> : vector<8x512xf32>
    %82 = tpu.matmul %76, %7, %cst_25 {dimension_numbers = #tpu.dot_dimension_numbers<[1], [0], [0], [1], [0, 0, 1, 1], [], []>} : vector<8x20xf32>, vector<20x512xf32>, vector<8x512xf32> -> vector<8x512xf32>
    %83 = arith.addf %81, %82 : vector<8x512xf32>
    %84 = vector.extract_strided_slice %83 {offsets = [0, 0], sizes = [8, 384], strides = [1, 1]} : vector<8x512xf32> to vector<8x384xf32>
    %85 = arith.negf %84 : vector<8x384xf32>
    %86 = math.exp %85 : vector<8x384xf32>
    %cst_26 = arith.constant 1.000000e+00 : f32
    %87 = vector.broadcast %cst_26 : f32 to vector<8x384xf32>
    %88 = arith.addf %87, %86 : vector<8x384xf32>
    %89 = arith.divf %87, %88 : vector<8x384xf32>
    %90 = vector.extract_strided_slice %89 {offsets = [0, 0], sizes = [8, 20], strides = [1, 1]} : vector<8x384xf32> to vector<8x20xf32>
    %91 = vector.extract_strided_slice %89 {offsets = [0, 128], sizes = [8, 20], strides = [1, 1]} : vector<8x384xf32> to vector<8x20xf32>
    %92 = vector.extract_strided_slice %89 {offsets = [0, 256], sizes = [8, 20], strides = [1, 1]} : vector<8x384xf32> to vector<8x20xf32>
    %93 = vector.extract_strided_slice %83 {offsets = [0, 384], sizes = [8, 20], strides = [1, 1]} : vector<8x512xf32> to vector<8x20xf32>
    %94 = math.tanh %93 : vector<8x20xf32>
    %95 = arith.mulf %91, %74 : vector<8x20xf32>
    %96 = arith.mulf %90, %94 : vector<8x20xf32>
    %97 = arith.addf %95, %96 : vector<8x20xf32>
    %98 = math.tanh %97 : vector<8x20xf32>
    %99 = arith.mulf %92, %98 : vector<8x20xf32>
    %100 = vector.extract_strided_slice %8 {offsets = [3, 0], sizes = [1, 20], strides = [1, 1]} : vector<8x20xf32> to vector<1x20xf32>
    %101 = vector.broadcast %100 : vector<1x20xf32> to vector<8x20xf32>
    %102 = arith.mulf %99, %101 : vector<8x20xf32>
    %103 = arith.addf %80, %102 : vector<8x20xf32>
    %c32 = arith.constant 32 : index
    %c0_27 = arith.constant 0 : index
    %104 = vector.load %arg7[%c32, %c0_27] : memref<64x512xf32, #tpu.memory_space<vmem>>, vector<8x512xf32>
    %cst_28 = arith.constant dense<0.000000e+00> : vector<8x512xf32>
    %105 = tpu.matmul %99, %7, %cst_28 {dimension_numbers = #tpu.dot_dimension_numbers<[1], [0], [0], [1], [0, 0, 1, 1], [], []>} : vector<8x20xf32>, vector<20x512xf32>, vector<8x512xf32> -> vector<8x512xf32>
    %106 = arith.addf %104, %105 : vector<8x512xf32>
    %107 = vector.extract_strided_slice %106 {offsets = [0, 0], sizes = [8, 384], strides = [1, 1]} : vector<8x512xf32> to vector<8x384xf32>
    %108 = arith.negf %107 : vector<8x384xf32>
    %109 = math.exp %108 : vector<8x384xf32>
    %cst_29 = arith.constant 1.000000e+00 : f32
    %110 = vector.broadcast %cst_29 : f32 to vector<8x384xf32>
    %111 = arith.addf %110, %109 : vector<8x384xf32>
    %112 = arith.divf %110, %111 : vector<8x384xf32>
    %113 = vector.extract_strided_slice %112 {offsets = [0, 0], sizes = [8, 20], strides = [1, 1]} : vector<8x384xf32> to vector<8x20xf32>
    %114 = vector.extract_strided_slice %112 {offsets = [0, 128], sizes = [8, 20], strides = [1, 1]} : vector<8x384xf32> to vector<8x20xf32>
    %115 = vector.extract_strided_slice %112 {offsets = [0, 256], sizes = [8, 20], strides = [1, 1]} : vector<8x384xf32> to vector<8x20xf32>
    %116 = vector.extract_strided_slice %106 {offsets = [0, 384], sizes = [8, 20], strides = [1, 1]} : vector<8x512xf32> to vector<8x20xf32>
    %117 = math.tanh %116 : vector<8x20xf32>
    %118 = arith.mulf %114, %97 : vector<8x20xf32>
    %119 = arith.mulf %113, %117 : vector<8x20xf32>
    %120 = arith.addf %118, %119 : vector<8x20xf32>
    %121 = math.tanh %120 : vector<8x20xf32>
    %122 = arith.mulf %115, %121 : vector<8x20xf32>
    %123 = vector.extract_strided_slice %8 {offsets = [4, 0], sizes = [1, 20], strides = [1, 1]} : vector<8x20xf32> to vector<1x20xf32>
    %124 = vector.broadcast %123 : vector<1x20xf32> to vector<8x20xf32>
    %125 = arith.mulf %122, %124 : vector<8x20xf32>
    %126 = arith.addf %103, %125 : vector<8x20xf32>
    %c40 = arith.constant 40 : index
    %c0_30 = arith.constant 0 : index
    %127 = vector.load %arg7[%c40, %c0_30] : memref<64x512xf32, #tpu.memory_space<vmem>>, vector<8x512xf32>
    %cst_31 = arith.constant dense<0.000000e+00> : vector<8x512xf32>
    %128 = tpu.matmul %122, %7, %cst_31 {dimension_numbers = #tpu.dot_dimension_numbers<[1], [0], [0], [1], [0, 0, 1, 1], [], []>} : vector<8x20xf32>, vector<20x512xf32>, vector<8x512xf32> -> vector<8x512xf32>
    %129 = arith.addf %127, %128 : vector<8x512xf32>
    %130 = vector.extract_strided_slice %129 {offsets = [0, 0], sizes = [8, 384], strides = [1, 1]} : vector<8x512xf32> to vector<8x384xf32>
    %131 = arith.negf %130 : vector<8x384xf32>
    %132 = math.exp %131 : vector<8x384xf32>
    %cst_32 = arith.constant 1.000000e+00 : f32
    %133 = vector.broadcast %cst_32 : f32 to vector<8x384xf32>
    %134 = arith.addf %133, %132 : vector<8x384xf32>
    %135 = arith.divf %133, %134 : vector<8x384xf32>
    %136 = vector.extract_strided_slice %135 {offsets = [0, 0], sizes = [8, 20], strides = [1, 1]} : vector<8x384xf32> to vector<8x20xf32>
    %137 = vector.extract_strided_slice %135 {offsets = [0, 128], sizes = [8, 20], strides = [1, 1]} : vector<8x384xf32> to vector<8x20xf32>
    %138 = vector.extract_strided_slice %135 {offsets = [0, 256], sizes = [8, 20], strides = [1, 1]} : vector<8x384xf32> to vector<8x20xf32>
    %139 = vector.extract_strided_slice %129 {offsets = [0, 384], sizes = [8, 20], strides = [1, 1]} : vector<8x512xf32> to vector<8x20xf32>
    %140 = math.tanh %139 : vector<8x20xf32>
    %141 = arith.mulf %137, %120 : vector<8x20xf32>
    %142 = arith.mulf %136, %140 : vector<8x20xf32>
    %143 = arith.addf %141, %142 : vector<8x20xf32>
    %144 = math.tanh %143 : vector<8x20xf32>
    %145 = arith.mulf %138, %144 : vector<8x20xf32>
    %146 = vector.extract_strided_slice %8 {offsets = [5, 0], sizes = [1, 20], strides = [1, 1]} : vector<8x20xf32> to vector<1x20xf32>
    %147 = vector.broadcast %146 : vector<1x20xf32> to vector<8x20xf32>
    %148 = arith.mulf %145, %147 : vector<8x20xf32>
    %149 = arith.addf %126, %148 : vector<8x20xf32>
    %c48 = arith.constant 48 : index
    %c0_33 = arith.constant 0 : index
    %150 = vector.load %arg7[%c48, %c0_33] : memref<64x512xf32, #tpu.memory_space<vmem>>, vector<8x512xf32>
    %cst_34 = arith.constant dense<0.000000e+00> : vector<8x512xf32>
    %151 = tpu.matmul %145, %7, %cst_34 {dimension_numbers = #tpu.dot_dimension_numbers<[1], [0], [0], [1], [0, 0, 1, 1], [], []>} : vector<8x20xf32>, vector<20x512xf32>, vector<8x512xf32> -> vector<8x512xf32>
    %152 = arith.addf %150, %151 : vector<8x512xf32>
    %153 = vector.extract_strided_slice %152 {offsets = [0, 0], sizes = [8, 384], strides = [1, 1]} : vector<8x512xf32> to vector<8x384xf32>
    %154 = arith.negf %153 : vector<8x384xf32>
    %155 = math.exp %154 : vector<8x384xf32>
    %cst_35 = arith.constant 1.000000e+00 : f32
    %156 = vector.broadcast %cst_35 : f32 to vector<8x384xf32>
    %157 = arith.addf %156, %155 : vector<8x384xf32>
    %158 = arith.divf %156, %157 : vector<8x384xf32>
    %159 = vector.extract_strided_slice %158 {offsets = [0, 0], sizes = [8, 20], strides = [1, 1]} : vector<8x384xf32> to vector<8x20xf32>
    %160 = vector.extract_strided_slice %158 {offsets = [0, 128], sizes = [8, 20], strides = [1, 1]} : vector<8x384xf32> to vector<8x20xf32>
    %161 = vector.extract_strided_slice %158 {offsets = [0, 256], sizes = [8, 20], strides = [1, 1]} : vector<8x384xf32> to vector<8x20xf32>
    %162 = vector.extract_strided_slice %152 {offsets = [0, 384], sizes = [8, 20], strides = [1, 1]} : vector<8x512xf32> to vector<8x20xf32>
    %163 = math.tanh %162 : vector<8x20xf32>
    %164 = arith.mulf %160, %143 : vector<8x20xf32>
    %165 = arith.mulf %159, %163 : vector<8x20xf32>
    %166 = arith.addf %164, %165 : vector<8x20xf32>
    %167 = math.tanh %166 : vector<8x20xf32>
    %168 = arith.mulf %161, %167 : vector<8x20xf32>
    %169 = vector.extract_strided_slice %8 {offsets = [6, 0], sizes = [1, 20], strides = [1, 1]} : vector<8x20xf32> to vector<1x20xf32>
    %170 = vector.broadcast %169 : vector<1x20xf32> to vector<8x20xf32>
    %171 = arith.mulf %168, %170 : vector<8x20xf32>
    %172 = arith.addf %149, %171 : vector<8x20xf32>
    %c56 = arith.constant 56 : index
    %c0_36 = arith.constant 0 : index
    %173 = vector.load %arg7[%c56, %c0_36] : memref<64x512xf32, #tpu.memory_space<vmem>>, vector<8x512xf32>
    %cst_37 = arith.constant dense<0.000000e+00> : vector<8x512xf32>
    %174 = tpu.matmul %168, %7, %cst_37 {dimension_numbers = #tpu.dot_dimension_numbers<[1], [0], [0], [1], [0, 0, 1, 1], [], []>} : vector<8x20xf32>, vector<20x512xf32>, vector<8x512xf32> -> vector<8x512xf32>
    %175 = arith.addf %173, %174 : vector<8x512xf32>
    %176 = vector.extract_strided_slice %175 {offsets = [0, 0], sizes = [8, 384], strides = [1, 1]} : vector<8x512xf32> to vector<8x384xf32>
    %177 = arith.negf %176 : vector<8x384xf32>
    %178 = math.exp %177 : vector<8x384xf32>
    %cst_38 = arith.constant 1.000000e+00 : f32
    %179 = vector.broadcast %cst_38 : f32 to vector<8x384xf32>
    %180 = arith.addf %179, %178 : vector<8x384xf32>
    %181 = arith.divf %179, %180 : vector<8x384xf32>
    %182 = vector.extract_strided_slice %181 {offsets = [0, 0], sizes = [8, 20], strides = [1, 1]} : vector<8x384xf32> to vector<8x20xf32>
    %183 = vector.extract_strided_slice %181 {offsets = [0, 128], sizes = [8, 20], strides = [1, 1]} : vector<8x384xf32> to vector<8x20xf32>
    %184 = vector.extract_strided_slice %181 {offsets = [0, 256], sizes = [8, 20], strides = [1, 1]} : vector<8x384xf32> to vector<8x20xf32>
    %185 = vector.extract_strided_slice %175 {offsets = [0, 384], sizes = [8, 20], strides = [1, 1]} : vector<8x512xf32> to vector<8x20xf32>
    %186 = math.tanh %185 : vector<8x20xf32>
    %187 = arith.mulf %183, %166 : vector<8x20xf32>
    %188 = arith.mulf %182, %186 : vector<8x20xf32>
    %189 = arith.addf %187, %188 : vector<8x20xf32>
    %190 = math.tanh %189 : vector<8x20xf32>
    %191 = arith.mulf %184, %190 : vector<8x20xf32>
    %192 = vector.extract_strided_slice %8 {offsets = [7, 0], sizes = [1, 20], strides = [1, 1]} : vector<8x20xf32> to vector<1x20xf32>
    %193 = vector.broadcast %192 : vector<1x20xf32> to vector<8x20xf32>
    %194 = arith.mulf %191, %193 : vector<8x20xf32>
    %195 = arith.addf %172, %194 : vector<8x20xf32>
    %cst_39 = arith.constant dense<0.000000e+00> : vector<8xf32>
    %196 = vector.multi_reduction <add>, %195, %cst_39 [1] : vector<8x20xf32> to vector<8xf32>
    %197 = vector.shape_cast %196 : vector<8xf32> to vector<8x1xf32>
    %c0_40 = arith.constant 0 : index
    %c0_41 = arith.constant 0 : index
    %198 = vector.load %arg5[%c0_40, %c0_41] : memref<1x1xf32, #tpu.memory_space<vmem>>, vector<1x1xf32>
    %199 = vector.broadcast %198 : vector<1x1xf32> to vector<8x1xf32>
    %200 = arith.addf %197, %199 : vector<8x1xf32>
    %c0_42 = arith.constant 0 : index
    %c0_43 = arith.constant 0 : index
    %201 = vector.load %arg6[%c0_42, %c0_43] : memref<8x1xf32, #tpu.memory_space<vmem>>, vector<8x1xf32>
    tpu.vector_store %arg6[%c0_42, %c0_43], %200 {strides = array<i32>} : memref<8x1xf32, #tpu.memory_space<vmem>>, vector<8x1xf32>,
    return
  }
}

</mosaic_0001>

<llo_original>
// kernel: tpu_custom_call.1
$region0: #{tpu_custom_call.1}
  #allocation0 [shape = 'u32[]', space=smem, size = 0x4, offset = 0x4, fixed_abs, tag = 'smem constant byte address 0x4 - core index']
  #allocation1 [shape = 'u32[72,128]{1,0:T(1,128)}', space=vmem, size = 0x9000, scoped, tag = 'internal scratch']
  #allocation2 [shape = 'f32[64,512]{1,0:T(8,128)}', space=vmem, size = 0x20000, scoped, tag = 'scratch operand']
  #allocation3 [shape = 'f32[1,1]{1,0:T(1,128)S(1)}', space=vmem, size = 0x200, scoped, tag = 'scoped memory for tpu_custom_call.1']
  %s0 = inlined_call_operand.vmem [shape: f32[64,4], index: 0, kind: input, shape index: {}]
  %s1 = inlined_call_operand.vmem [shape: f32[4,512], index: 1, kind: input, shape index: {}]
  %s2 = inlined_call_operand.hbm [shape: f32[20,512], index: 2, kind: input, shape index: {}]
  %s3 = inlined_call_operand.vmem [shape: f32[1,512], index: 3, kind: input, shape index: {}]
  %s4 = inlined_call_operand.vmem [shape: f32[8,20], index: 4, kind: input, shape index: {}]
  %s5 = inlined_call_operand.<no memory space> [shape: f32[1,1], index: 5, kind: input, shape index: {}]
  %s6 = inlined_call_operand.vmem [shape: f32[8,1], index: 6, kind: output, shape index: {}]
  %s7 = sld [smem:[#allocation0]]
  $region38: #{tpu_custom_call.1} parent=0
    _
  %s9 = ssub.s32 1, %s7
  %s10 = scalar_select 0, %s9, %s7
  %v11 = vstv %s5
  %12 = vst [vmem:[#allocation3] sm:$0x1] %v11
  $region1: #{tpu_custom_call.1} parent=0
    #allocation4 [shape = 'u8[49152]{0}', space=vmem, size = 0xc000, scoped, tag = 'input window, operand 2, single buffered']
    #allocation5 [shape = 's32[1]{0}', space=sflag, size = 0x4, scoped, tag = 'scoped memory for tpu_custom_call.1']
    %13 = vsyncpa [#allocation5], 0
    // Predicated region
    $region2: #{tpu_custom_call.1} parent=1 // pred_check
      _
    $region3: #{tpu_custom_call.1} parent=1 // pred_check_branch
      %15 = sbr.rel (0) target = $region5
    $region4: #{tpu_custom_call.1} parent=1 // pred_region
      _
    $region5: #{tpu_custom_call.1} parent=1 // pred_fallthru
      _
    // Predicated region
    $region6: #{tpu_custom_call.1} parent=1 // pred_check
      _
    $region7: #{tpu_custom_call.1} parent=1 // pred_check_branch
      %17 = sbr.rel (0) target = $region9
    $region8: #{tpu_custom_call.1} parent=1 // pred_region
      _
    $region9: #{tpu_custom_call.1} parent=1 // pred_fallthru
      _
    // Predicated region
    $region10: #{tpu_custom_call.1} parent=1 // pred_check
      _
    $region11: #{tpu_custom_call.1} parent=1 // pred_check_branch
      %19 = sbr.rel (0) target = $region13
    $region12: #{tpu_custom_call.1} parent=1 // pred_region
      %21 = vsyncadd [#allocation5], 0
      %s22 = sshll.u32 %s2, 4
      %s23 = int_to_ptr.hbm [resolvable:$true] %s22
      %s24 = sshll.u32 [#allocation4], 4
      %s25 = int_to_ptr.vmem [resolvable:$true] %s24
      %30 = dma.hbm_to_vmem [thread:$0]  %s23, 1536, %s25, [#allocation5], 512, 512, 32
    $region13: #{tpu_custom_call.1} parent=1 // pred_fallthru
      _
    // Predicated region
    $region14: #{tpu_custom_call.1} parent=1 // pred_check
      _
    $region15: #{tpu_custom_call.1} parent=1 // pred_check_branch
      %32 = sbr.rel (0) target = $region17
    $region16: #{tpu_custom_call.1} parent=1 // pred_region
      _
    $region17: #{tpu_custom_call.1} parent=1 // pred_fallthru
      _
    // Predicated region
    $region18: #{tpu_custom_call.1} parent=1 // pred_check
      _
    $region19: #{tpu_custom_call.1} parent=1 // pred_check_branch
      %34 = sbr.rel (0) target = $region21
    $region20: #{tpu_custom_call.1} parent=1 // pred_region
      _
    $region21: #{tpu_custom_call.1} parent=1 // pred_fallthru
      _
    // Predicated region
    $region22: #{tpu_custom_call.1} parent=1 // pred_check
      _
    $region23: #{tpu_custom_call.1} parent=1 // pred_check_branch
      %36 = sbr.rel (0) target = $region25
    $region24: #{tpu_custom_call.1} parent=1 // pred_region
      _
    $region25: #{tpu_custom_call.1} parent=1 // pred_fallthru
      _
    // Predicated region
    $region26: #{tpu_custom_call.1} parent=1 // pred_check
      _
    $region27: #{tpu_custom_call.1} parent=1 // pred_check_branch
      %38 = sbr.rel (0) target = $region29
    $region28: #{tpu_custom_call.1} parent=1 // pred_region
      %40 = dma.done [#allocation5], 1536
    $region29: #{tpu_custom_call.1} parent=1 // pred_fallthru
      _
    %v41 = vld [vmem:[%s0] sm:$0xff]
    %v42 = vld [vmem:[%s0 + $0x8] sm:$0xff]
    %v43 = vld [vmem:[%s0 + $0x10] sm:$0xff]
    %v44 = vld [vmem:[%s0 + $0x18] sm:$0xff]
    %v45 = vld [vmem:[%s0 + $0x20] sm:$0xff]
    %v46 = vld [vmem:[%s0 + $0x28] sm:$0xff]
    %v47 = vld [vmem:[%s0 + $0x30] sm:$0xff]
    %v48 = vld [vmem:[%s0 + $0x38] sm:$0xff]
    %v49 = vld [vmem:[%s1] sm:$0xff]
    %v50 = vld [vmem:[%s1 + $0x8] sm:$0xff]
    %v51 = vld [vmem:[%s3] sm:$0xf]
    %v53 = vperm.slane %v51, 0
    %v54 = vperm.slane %v51, 1
    %v55 = vperm.slane %v51, 2
    %v56 = vperm.slane %v51, 3
    %63 = vst [vmem:[#allocation1] ss:$2 sm:$0xff] %v49
    %s64 = scalar_lea.vmem [#allocation1], 16
    %65 = vst [vmem:[%s64] ss:$2 sm:$0xff] %v50
    %v66 = vld.sshfl [vmem:[#allocation1] sm:$0xff pattern:$0x75316420]
    %v67 = vld.sshfl [vmem:[#allocation1 + $0x8] sm:$0xff pattern:$0x75316420]
    %v68 = vld.sshfl [vmem:[#allocation1 + $0x10] sm:$0xff pattern:$0x75316420]
    %v69 = vld.sshfl [vmem:[#allocation1 + $0x18] sm:$0xff pattern:$0x75316420]
    %vm70 = vcmask 31744
    %v72 = vsel %vm70, %v41, 0
    %v75 = vsel %vm70, %v42, 0
    %v78 = vsel %vm70, %v43, 0
    %v81 = vsel %vm70, %v44, 0
    %v84 = vsel %vm70, %v45, 0
    %v87 = vsel %vm70, %v46, 0
    %v90 = vsel %vm70, %v47, 0
    %v93 = vsel %vm70, %v48, 0
    %vm95 = vcmask 1043456
    %v96 = vsel %vm95, %v66, 0
    %v98 = vsel %vm95, %v67, 0
    %v100 = vsel %vm95, %v68, 0
    %v102 = vsel %vm95, %v69, 0
    %104 = vmatpush.msra.mxu0 0.0
    %105 = vmatpush.msra.mxu0 0.0
    %106 = vmatpush.msra.mxu0 0.0
    %107 = vmatpush.msra.mxu0 0.0
    %108 = vmatpush.msra.mxu0 0.0
    %109 = vmatpush.msra.mxu0 0.0
    %110 = vmatpush.msra.mxu0 0.0
    %111 = vmatpush.msra.mxu0 0.0
    %112 = vmatpush.msra.mxu0 0.0
    %113 = vmatpush.msra.mxu0 0.0
    %114 = vmatpush.msra.mxu0 0.0
    %115 = vmatpush.msra.mxu0 0.0
    %116 = vmatpush.msra.mxu0 0.0
    %117 = vmatpush.msra.mxu0 0.0
    %118 = vmatpush.msra.mxu0 0.0
    %119 = vmatpush.msra.mxu0 %v96
    %120 = vmatmul.f32.gmra.mxu0 %v72
    %v121 = vpop.f32.mrf.mxu0
    %v122 = vadd.f32 %v53, %v121
    %123 = vmatmul.f32.gmra.mxu0 %v75
    %v124 = vpop.f32.mrf.mxu0
    %v125 = vadd.f32 %v53, %v124
    %126 = vmatmul.f32.gmra.mxu0 %v78
    %v127 = vpop.f32.mrf.mxu0
    %v128 = vadd.f32 %v53, %v127
    %129 = vmatmul.f32.gmra.mxu0 %v81
    %v130 = vpop.f32.mrf.mxu0
    %v131 = vadd.f32 %v53, %v130
    %132 = vmatmul.f32.gmra.mxu0 %v84
    %v133 = vpop.f32.mrf.mxu0
    %v134 = vadd.f32 %v53, %v133
    %135 = vmatmul.f32.gmra.mxu0 %v87
    %v136 = vpop.f32.mrf.mxu0
    %v137 = vadd.f32 %v53, %v136
    %138 = vmatmul.f32.gmra.mxu0 %v90
    %v139 = vpop.f32.mrf.mxu0
    %v140 = vadd.f32 %v53, %v139
    %141 = vmatmul.f32.gmra.mxu0 %v93
    %v142 = vpop.f32.mrf.mxu0
    %v143 = vadd.f32 %v53, %v142
    %144 = vdwg.mxu0
    %145 = vmatpush.msra.mxu0 0.0
    %146 = vmatpush.msra.mxu0 0.0
    %147 = vmatpush.msra.mxu0 0.0
    %148 = vmatpush.msra.mxu0 0.0
    %149 = vmatpush.msra.mxu0 0.0
    %150 = vmatpush.msra.mxu0 0.0
    %151 = vmatpush.msra.mxu0 0.0
    %152 = vmatpush.msra.mxu0 0.0
    %153 = vmatpush.msra.mxu0 0.0
    %154 = vmatpush.msra.mxu0 0.0
    %155 = vmatpush.msra.mxu0 0.0
    %156 = vmatpush.msra.mxu0 0.0
    %157 = vmatpush.msra.mxu0 0.0
    %158 = vmatpush.msra.mxu0 0.0
    %159 = vmatpush.msra.mxu0 0.0
    %160 = vmatpush.msra.mxu0 %v98
    %161 = vmatmul.f32.gmra.mxu0 %v72
    %v162 = vpop.f32.mrf.mxu0
    %v163 = vadd.f32 %v54, %v162
    %164 = vmatmul.f32.gmra.mxu0 %v75
    %v165 = vpop.f32.mrf.mxu0
    %v166 = vadd.f32 %v54, %v165
    %167 = vmatmul.f32.gmra.mxu0 %v78
    %v168 = vpop.f32.mrf.mxu0
    %v169 = vadd.f32 %v54, %v168
    %170 = vmatmul.f32.gmra.mxu0 %v81
    %v171 = vpop.f32.mrf.mxu0
    %v172 = vadd.f32 %v54, %v171
    %173 = vmatmul.f32.gmra.mxu0 %v84
    %v174 = vpop.f32.mrf.mxu0
    %v175 = vadd.f32 %v54, %v174
    %176 = vmatmul.f32.gmra.mxu0 %v87
    %v177 = vpop.f32.mrf.mxu0
    %v178 = vadd.f32 %v54, %v177
    %179 = vmatmul.f32.gmra.mxu0 %v90
    %v180 = vpop.f32.mrf.mxu0
    %v181 = vadd.f32 %v54, %v180
    %182 = vmatmul.f32.gmra.mxu0 %v93
    %v183 = vpop.f32.mrf.mxu0
    %v184 = vadd.f32 %v54, %v183
    %185 = vdwg.mxu0
    %186 = vmatpush.msra.mxu0 0.0
    %187 = vmatpush.msra.mxu0 0.0
    %188 = vmatpush.msra.mxu0 0.0
    %189 = vmatpush.msra.mxu0 0.0
    %190 = vmatpush.msra.mxu0 0.0
    %191 = vmatpush.msra.mxu0 0.0
    %192 = vmatpush.msra.mxu0 0.0
    %193 = vmatpush.msra.mxu0 0.0
    %194 = vmatpush.msra.mxu0 0.0
    %195 = vmatpush.msra.mxu0 0.0
    %196 = vmatpush.msra.mxu0 0.0
    %197 = vmatpush.msra.mxu0 0.0
    %198 = vmatpush.msra.mxu0 0.0
    %199 = vmatpush.msra.mxu0 0.0
    %200 = vmatpush.msra.mxu0 0.0
    %201 = vmatpush.msra.mxu0 %v100
    %202 = vmatmul.f32.gmra.mxu0 %v72
    %v203 = vpop.f32.mrf.mxu0
    %v204 = vadd.f32 %v55, %v203
    %205 = vmatmul.f32.gmra.mxu0 %v75
    %v206 = vpop.f32.mrf.mxu0
    %v207 = vadd.f32 %v55, %v206
    %208 = vmatmul.f32.gmra.mxu0 %v78
    %v209 = vpop.f32.mrf.mxu0
    %v210 = vadd.f32 %v55, %v209
    %211 = vmatmul.f32.gmra.mxu0 %v81
    %v212 = vpop.f32.mrf.mxu0
    %v213 = vadd.f32 %v55, %v212
    %214 = vmatmul.f32.gmra.mxu0 %v84
    %v215 = vpop.f32.mrf.mxu0
    %v216 = vadd.f32 %v55, %v215
    %217 = vmatmul.f32.gmra.mxu0 %v87
    %v218 = vpop.f32.mrf.mxu0
    %v219 = vadd.f32 %v55, %v218
    %220 = vmatmul.f32.gmra.mxu0 %v90
    %v221 = vpop.f32.mrf.mxu0
    %v222 = vadd.f32 %v55, %v221
    %223 = vmatmul.f32.gmra.mxu0 %v93
    %v224 = vpop.f32.mrf.mxu0
    %v225 = vadd.f32 %v55, %v224
    %226 = vdwg.mxu0
    %227 = vmatpush.msra.mxu0 0.0
    %228 = vmatpush.msra.mxu0 0.0
    %229 = vmatpush.msra.mxu0 0.0
    %230 = vmatpush.msra.mxu0 0.0
    %231 = vmatpush.msra.mxu0 0.0
    %232 = vmatpush.msra.mxu0 0.0
    %233 = vmatpush.msra.mxu0 0.0
    %234 = vmatpush.msra.mxu0 0.0
    %235 = vmatpush.msra.mxu0 0.0
    %236 = vmatpush.msra.mxu0 0.0
    %237 = vmatpush.msra.mxu0 0.0
    %238 = vmatpush.msra.mxu0 0.0
    %239 = vmatpush.msra.mxu0 0.0
    %240 = vmatpush.msra.mxu0 0.0
    %241 = vmatpush.msra.mxu0 0.0
    %242 = vmatpush.msra.mxu0 %v102
    %243 = vmatmul.f32.gmra.mxu0 %v72
    %v244 = vpop.f32.mrf.mxu0
    %v245 = vadd.f32 %v56, %v244
    %246 = vmatmul.f32.gmra.mxu0 %v75
    %v247 = vpop.f32.mrf.mxu0
    %v248 = vadd.f32 %v56, %v247
    %249 = vmatmul.f32.gmra.mxu0 %v78
    %v250 = vpop.f32.mrf.mxu0
    %v251 = vadd.f32 %v56, %v250
    %252 = vmatmul.f32.gmra.mxu0 %v81
    %v253 = vpop.f32.mrf.mxu0
    %v254 = vadd.f32 %v56, %v253
    %255 = vmatmul.f32.gmra.mxu0 %v84
    %v256 = vpop.f32.mrf.mxu0
    %v257 = vadd.f32 %v56, %v256
    %258 = vmatmul.f32.gmra.mxu0 %v87
    %v259 = vpop.f32.mrf.mxu0
    %v260 = vadd.f32 %v56, %v259
    %261 = vmatmul.f32.gmra.mxu0 %v90
    %v262 = vpop.f32.mrf.mxu0
    %v263 = vadd.f32 %v56, %v262
    %264 = vmatmul.f32.gmra.mxu0 %v93
    %v265 = vpop.f32.mrf.mxu0
    %v266 = vadd.f32 %v56, %v265
    %267 = vdwg.mxu0
    %268 = vst [vmem:[#allocation2] sm:$0xff] %v122
    %269 = vst [vmem:[#allocation2 + $0x8] sm:$0xff] %v163
    %270 = vst [vmem:[#allocation2 + $0x10] sm:$0xff] %v204
    %271 = vst [vmem:[#allocation2 + $0x18] sm:$0xff] %v245
    %272 = vst [vmem:[#allocation2 + $0x20] sm:$0xff] %v125
    %273 = vst [vmem:[#allocation2 + $0x28] sm:$0xff] %v166
    %274 = vst [vmem:[#allocation2 + $0x30] sm:$0xff] %v207
    %275 = vst [vmem:[#allocation2 + $0x38] sm:$0xff] %v248
    %276 = vst [vmem:[#allocation2 + $0x40] sm:$0xff] %v128
    %277 = vst [vmem:[#allocation2 + $0x48] sm:$0xff] %v169
    %278 = vst [vmem:[#allocation2 + $0x50] sm:$0xff] %v210
    %279 = vst [vmem:[#allocation2 + $0x58] sm:$0xff] %v251
    %280 = vst [vmem:[#allocation2 + $0x60] sm:$0xff] %v131
    %281 = vst [vmem:[#allocation2 + $0x68] sm:$0xff] %v172
    %282 = vst [vmem:[#allocation2 + $0x70] sm:$0xff] %v213
    %283 = vst [vmem:[#allocation2 + $0x78] sm:$0xff] %v254
    %284 = vst [vmem:[#allocation2 + $0x80] sm:$0xff] %v134
    %285 = vst [vmem:[#allocation2 + $0x88] sm:$0xff] %v175
    %286 = vst [vmem:[#allocation2 + $0x90] sm:$0xff] %v216
    %287 = vst [vmem:[#allocation2 + $0x98] sm:$0xff] %v257
    %288 = vst [vmem:[#allocation2 + $0xa0] sm:$0xff] %v137
    %289 = vst [vmem:[#allocation2 + $0xa8] sm:$0xff] %v178
    %290 = vst [vmem:[#allocation2 + $0xb0] sm:$0xff] %v219
    %291 = vst [vmem:[#allocation2 + $0xb8] sm:$0xff] %v260
    %292 = vst [vmem:[#allocation2 + $0xc0] sm:$0xff] %v140
    %293 = vst [vmem:[#allocation2 + $0xc8] sm:$0xff] %v181
    %294 = vst [vmem:[#allocation2 + $0xd0] sm:$0xff] %v222
    %295 = vst [vmem:[#allocation2 + $0xd8] sm:$0xff] %v263
    %296 = vst [vmem:[#allocation2 + $0xe0] sm:$0xff] %v143
    %297 = vst [vmem:[#allocation2 + $0xe8] sm:$0xff] %v184
    %298 = vst [vmem:[#allocation2 + $0xf0] sm:$0xff] %v225
    %299 = vst [vmem:[#allocation2 + $0xf8] sm:$0xff] %v266
    %v300 = vld [vmem:[#allocation4] sm:$0xff]
    %v301 = vld [vmem:[#allocation4 + $0x8] sm:$0xff]
    %v302 = vld [vmem:[#allocation4 + $0x10] sm:$0xff]
    %v303 = vld [vmem:[#allocation4 + $0x18] sm:$0xff]
    %v304 = vld [vmem:[#allocation4 + $0x20] sm:$0xff]
    %v305 = vld [vmem:[#allocation4 + $0x28] sm:$0xff]
    %v306 = vld [vmem:[#allocation4 + $0x30] sm:$0xff]
    %v307 = vld [vmem:[#allocation4 + $0x38] sm:$0xff]
    %v308 = vld [vmem:[#allocation4 + $0x40] sm:$0xf]
    %v309 = vld [vmem:[#allocation4 + $0x48] sm:$0xf]
    %v310 = vld [vmem:[#allocation4 + $0x50] sm:$0xf]
    %v311 = vld [vmem:[#allocation4 + $0x58] sm:$0xf]
    %v312 = vld [vmem:[%s4] sm:$0xff]
    %v313 = vld [vmem:[#allocation2] sm:$0xff]
    %v314 = vld [vmem:[#allocation2 + $0x8] sm:$0xff]
    %v315 = vld [vmem:[#allocation2 + $0x10] sm:$0xff]
    %v316 = vld [vmem:[#allocation2 + $0x18] sm:$0xff]
    %vm317 = vcmask 162816
    %v319 = vsel %vm317, 0.0, 0
    %v322 = vsel %vm95, %v308, 0
    %v325 = vsel %vm95, %v309, 0
    %v328 = vsel %vm95, %v310, 0
    %v331 = vsel %vm95, %v311, 0
    %333 = vmatpush.msra.mxu0 0.0
    %334 = vmatpush.msra.mxu0 0.0
    %335 = vmatpush.msra.mxu0 0.0
    %336 = vmatpush.msra.mxu0 0.0
    %337 = vmatpush.msra.mxu0 0.0
    %338 = vmatpush.msra.mxu0 0.0
    %339 = vmatpush.msra.mxu0 0.0
    %340 = vmatpush.msra.mxu0 0.0
    %341 = vmatpush.msra.mxu0 0.0
    %342 = vmatpush.msra.mxu0 0.0
    %343 = vmatpush.msra.mxu0 0.0
    %344 = vmatpush.msra.mxu0 0.0
    %345 = vmatpush.msra.mxu0 0.0
    %346 = vmatpush.msra.mxu0 %v322
    %347 = vmatpush.msra.mxu0 %v304
    %348 = vmatpush.msra.mxu0 %v300
    %349 = vmatmul.f32.gmra.mxu0 %v319
    %v350 = vpop.f32.mrf.mxu0
    %v351 = vadd.f32 0.0, %v350
    %352 = vdwg.mxu0
    %353 = vmatpush.msra.mxu0 0.0
    %354 = vmatpush.msra.mxu0 0.0
    %355 = vmatpush.msra.mxu0 0.0
    %356 = vmatpush.msra.mxu0 0.0
    %357 = vmatpush.msra.mxu0 0.0
    %358 = vmatpush.msra.mxu0 0.0
    %359 = vmatpush.msra.mxu0 0.0
    %360 = vmatpush.msra.mxu0 0.0
    %361 = vmatpush.msra.mxu0 0.0
    %362 = vmatpush.msra.mxu0 0.0
    %363 = vmatpush.msra.mxu0 0.0
    %364 = vmatpush.msra.mxu0 0.0
    %365 = vmatpush.msra.mxu0 0.0
    %366 = vmatpush.msra.mxu0 %v325
    %367 = vmatpush.msra.mxu0 %v305
    %368 = vmatpush.msra.mxu0 %v301
    %369 = vmatmul.f32.gmra.mxu0 %v319
    %v370 = vpop.f32.mrf.mxu0
    %v371 = vadd.f32 0.0, %v370
    %372 = vdwg.mxu0
    %373 = vmatpush.msra.mxu0 0.0
    %374 = vmatpush.msra.mxu0 0.0
    %375 = vmatpush.msra.mxu0 0.0
    %376 = vmatpush.msra.mxu0 0.0
    %377 = vmatpush.msra.mxu0 0.0
    %378 = vmatpush.msra.mxu0 0.0
    %379 = vmatpush.msra.mxu0 0.0
    %380 = vmatpush.msra.mxu0 0.0
    %381 = vmatpush.msra.mxu0 0.0
    %382 = vmatpush.msra.mxu0 0.0
    %383 = vmatpush.msra.mxu0 0.0
    %384 = vmatpush.msra.mxu0 0.0
    %385 = vmatpush.msra.mxu0 0.0
    %386 = vmatpush.msra.mxu0 %v328
    %387 = vmatpush.msra.mxu0 %v306
    %388 = vmatpush.msra.mxu0 %v302
    %389 = vmatmul.f32.gmra.mxu0 %v319
    %v390 = vpop.f32.mrf.mxu0
    %v391 = vadd.f32 0.0, %v390
    %392 = vdwg.mxu0
    %393 = vmatpush.msra.mxu0 0.0
    %394 = vmatpush.msra.mxu0 0.0
    %395 = vmatpush.msra.mxu0 0.0
    %396 = vmatpush.msra.mxu0 0.0
    %397 = vmatpush.msra.mxu0 0.0
    %398 = vmatpush.msra.mxu0 0.0
    %399 = vmatpush.msra.mxu0 0.0
    %400 = vmatpush.msra.mxu0 0.0
    %401 = vmatpush.msra.mxu0 0.0
    %402 = vmatpush.msra.mxu0 0.0
    %403 = vmatpush.msra.mxu0 0.0
    %404 = vmatpush.msra.mxu0 0.0
    %405 = vmatpush.msra.mxu0 0.0
    %406 = vmatpush.msra.mxu0 %v331
    %407 = vmatpush.msra.mxu0 %v307
    %408 = vmatpush.msra.mxu0 %v303
    %409 = vmatmul.f32.gmra.mxu0 %v319
    %v410 = vpop.f32.mrf.mxu0
    %v411 = vadd.f32 0.0, %v410
    %412 = vdwg.mxu0
    %v413 = vadd.f32 %v313, %v351
    %v414 = vadd.f32 %v314, %v371
    %v415 = vadd.f32 %v315, %v391
    %v416 = vadd.f32 %v316, %v411
    %v417 = vxor.u32 %v413, 2147483648
    %v418 = vxor.u32 %v414, 2147483648
    %v419 = vxor.u32 %v415, 2147483648
    %v420 = vmul.f32 %v417, 1.442695
    %v421 = vpow.pop %v420
    %v422 = vmul.f32 %v418, 1.442695
    %v423 = vpow.pop %v422
    %v424 = vmul.f32 %v419, 1.442695
    %v425 = vpow.pop %v424
    %v426 = vadd.f32 %v421, 1.0
    %v427 = vadd.f32 %v423, 1.0
    %v428 = vadd.f32 %v425, 1.0
    %v429 = vrcp.pop %v426
    %v430 = vmul.f32 %v426, %v429
    %v431 = vsub.f32 1.0, %v430
    %v432 = vmul.f32 %v429, %v431
    %v433 = vadd.f32 %v429, %v432
    %vm434 = vweird.f32 %v426
    %vm435 = vweird.f32 %v429
    %vm436 = vmor %vm434, %vm435
    %v437 = vsel %vm436, %v429, %v433
    %v438 = vand.u32 2147483647, %v426
    %vm439 = vcmp.eq.f32.partialorder %v438, 8.507059e+37
    %v440 = vand.u32 %v426, 2147483648
    %v441 = vor.u32 1.1754944e-38, %v440
    %v442 = vsel %vm439, %v441, %v437
    %v443 = vmul.f32 1.0, %v442
    %v444 = vrcp.pop %v427
    %v445 = vmul.f32 %v427, %v444
    %v446 = vsub.f32 1.0, %v445
    %v447 = vmul.f32 %v444, %v446
    %v448 = vadd.f32 %v444, %v447
    %vm449 = vweird.f32 %v427
    %vm450 = vweird.f32 %v444
    %vm451 = vmor %vm449, %vm450
    %v452 = vsel %vm451, %v444, %v448
    %v453 = vand.u32 2147483647, %v427
    %vm454 = vcmp.eq.f32.partialorder %v453, 8.507059e+37
    %v455 = vand.u32 %v427, 2147483648
    %v456 = vor.u32 1.1754944e-38, %v455
    %v457 = vsel %vm454, %v456, %v452
    %v458 = vmul.f32 1.0, %v457
    %v459 = vrcp.pop %v428
    %v460 = vmul.f32 %v428, %v459
    %v461 = vsub.f32 1.0, %v460
    %v462 = vmul.f32 %v459, %v461
    %v463 = vadd.f32 %v459, %v462
    %vm464 = vweird.f32 %v428
    %vm465 = vweird.f32 %v459
    %vm466 = vmor %vm464, %vm465
    %v467 = vsel %vm466, %v459, %v463
    %v468 = vand.u32 2147483647, %v428
    %vm469 = vcmp.eq.f32.partialorder %v468, 8.507059e+37
    %v470 = vand.u32 %v428, 2147483648
    %v471 = vor.u32 1.1754944e-38, %v470
    %v472 = vsel %vm469, %v471, %v467
    %v473 = vmul.f32 1.0, %v472
    %v474 = vtanh.pop %v416
    %v475 = vmul.f32 %v458, 0.0
    %v476 = vmul.f32 %v443, %v474
    %v477 = vadd.f32 %v475, %v476
    %v478 = vtanh.pop %v477
    %v479 = vmul.f32 %v473, %v478
    %v480 = vperm.slane %v312, 0
    %v481 = vmul.f32 %v479, %v480
    %v482 = vadd.f32 %v481, 0.0
    %v483 = vld [vmem:[#allocation2 + $0x20] sm:$0xff]
    %v484 = vld [vmem:[#allocation2 + $0x28] sm:$0xff]
    %v485 = vld [vmem:[#allocation2 + $0x30] sm:$0xff]
    %v486 = vld [vmem:[#allocation2 + $0x38] sm:$0xff]
    %v488 = vsel %vm317, %v479, 0
    %490 = vmatpush.msra.mxu0 0.0
    %491 = vmatpush.msra.mxu0 0.0
    %492 = vmatpush.msra.mxu0 0.0
    %493 = vmatpush.msra.mxu0 0.0
    %494 = vmatpush.msra.mxu0 0.0
    %495 = vmatpush.msra.mxu0 0.0
    %496 = vmatpush.msra.mxu0 0.0
    %497 = vmatpush.msra.mxu0 0.0
    %498 = vmatpush.msra.mxu0 0.0
    %499 = vmatpush.msra.mxu0 0.0
    %500 = vmatpush.msra.mxu0 0.0
    %501 = vmatpush.msra.mxu0 0.0
    %502 = vmatpush.msra.mxu0 0.0
    %503 = vmatpush.msra.mxu0 %v322
    %504 = vmatpush.msra.mxu0 %v304
    %505 = vmatpush.msra.mxu0 %v300
    %506 = vmatmul.f32.gmra.mxu0 %v488
    %v507 = vpop.f32.mrf.mxu0
    %v508 = vadd.f32 0.0, %v507
    %509 = vdwg.mxu0
    %510 = vmatpush.msra.mxu0 0.0
    %511 = vmatpush.msra.mxu0 0.0
    %512 = vmatpush.msra.mxu0 0.0
    %513 = vmatpush.msra.mxu0 0.0
    %514 = vmatpush.msra.mxu0 0.0
    %515 = vmatpush.msra.mxu0 0.0
    %516 = vmatpush.msra.mxu0 0.0
    %517 = vmatpush.msra.mxu0 0.0
    %518 = vmatpush.msra.mxu0 0.0
    %519 = vmatpush.msra.mxu0 0.0
    %520 = vmatpush.msra.mxu0 0.0
    %521 = vmatpush.msra.mxu0 0.0
    %522 = vmatpush.msra.mxu0 0.0
    %523 = vmatpush.msra.mxu0 %v325
    %524 = vmatpush.msra.mxu0 %v305
    %525 = vmatpush.msra.mxu0 %v301
    %526 = vmatmul.f32.gmra.mxu0 %v488
    %v527 = vpop.f32.mrf.mxu0
    %v528 = vadd.f32 0.0, %v527
    %529 = vdwg.mxu0
    %530 = vmatpush.msra.mxu0 0.0
    %531 = vmatpush.msra.mxu0 0.0
    %532 = vmatpush.msra.mxu0 0.0
    %533 = vmatpush.msra.mxu0 0.0
    %534 = vmatpush.msra.mxu0 0.0
    %535 = vmatpush.msra.mxu0 0.0
    %536 = vmatpush.msra.mxu0 0.0
    %537 = vmatpush.msra.mxu0 0.0
    %538 = vmatpush.msra.mxu0 0.0
    %539 = vmatpush.msra.mxu0 0.0
    %540 = vmatpush.msra.mxu0 0.0
    %541 = vmatpush.msra.mxu0 0.0
    %542 = vmatpush.msra.mxu0 0.0
    %543 = vmatpush.msra.mxu0 %v328
    %544 = vmatpush.msra.mxu0 %v306
    %545 = vmatpush.msra.mxu0 %v302
    %546 = vmatmul.f32.gmra.mxu0 %v488
    %v547 = vpop.f32.mrf.mxu0
    %v548 = vadd.f32 0.0, %v547
    %549 = vdwg.mxu0
    %550 = vmatpush.msra.mxu0 0.0
    %551 = vmatpush.msra.mxu0 0.0
    %552 = vmatpush.msra.mxu0 0.0
    %553 = vmatpush.msra.mxu0 0.0
    %554 = vmatpush.msra.mxu0 0.0
    %555 = vmatpush.msra.mxu0 0.0
    %556 = vmatpush.msra.mxu0 0.0
    %557 = vmatpush.msra.mxu0 0.0
    %558 = vmatpush.msra.mxu0 0.0
    %559 = vmatpush.msra.mxu0 0.0
    %560 = vmatpush.msra.mxu0 0.0
    %561 = vmatpush.msra.mxu0 0.0
    %562 = vmatpush.msra.mxu0 0.0
    %563 = vmatpush.msra.mxu0 %v331
    %564 = vmatpush.msra.mxu0 %v307
    %565 = vmatpush.msra.mxu0 %v303
    %566 = vmatmul.f32.gmra.mxu0 %v488
    %v567 = vpop.f32.mrf.mxu0
    %v568 = vadd.f32 0.0, %v567
    %569 = vdwg.mxu0
    %v570 = vadd.f32 %v483, %v508
    %v571 = vadd.f32 %v484, %v528
    %v572 = vadd.f32 %v485, %v548
    %v573 = vadd.f32 %v486, %v568
    %v574 = vxor.u32 %v570, 2147483648
    %v575 = vxor.u32 %v571, 2147483648
    %v576 = vxor.u32 %v572, 2147483648
    %v577 = vmul.f32 %v574, 1.442695
    %v578 = vpow.pop %v577
    %v579 = vmul.f32 %v575, 1.442695
    %v580 = vpow.pop %v579
    %v581 = vmul.f32 %v576, 1.442695
    %v582 = vpow.pop %v581
    %v583 = vadd.f32 %v578, 1.0
    %v584 = vadd.f32 %v580, 1.0
    %v585 = vadd.f32 %v582, 1.0
    %v586 = vrcp.pop %v583
    %v587 = vmul.f32 %v583, %v586
    %v588 = vsub.f32 1.0, %v587
    %v589 = vmul.f32 %v586, %v588
    %v590 = vadd.f32 %v586, %v589
    %vm591 = vweird.f32 %v583
    %vm592 = vweird.f32 %v586
    %vm593 = vmor %vm591, %vm592
    %v594 = vsel %vm593, %v586, %v590
    %v595 = vand.u32 2147483647, %v583
    %vm596 = vcmp.eq.f32.partialorder %v595, 8.507059e+37
    %v597 = vand.u32 %v583, 2147483648
    %v598 = vor.u32 1.1754944e-38, %v597
    %v599 = vsel %vm596, %v598, %v594
    %v600 = vmul.f32 1.0, %v599
    %v601 = vrcp.pop %v584
    %v602 = vmul.f32 %v584, %v601
    %v603 = vsub.f32 1.0, %v602
    %v604 = vmul.f32 %v601, %v603
    %v605 = vadd.f32 %v601, %v604
    %vm606 = vweird.f32 %v584
    %vm607 = vweird.f32 %v601
    %vm608 = vmor %vm606, %vm607
    %v609 = vsel %vm608, %v601, %v605
    %v610 = vand.u32 2147483647, %v584
    %vm611 = vcmp.eq.f32.partialorder %v610, 8.507059e+37
    %v612 = vand.u32 %v584, 2147483648
    %v613 = vor.u32 1.1754944e-38, %v612
    %v614 = vsel %vm611, %v613, %v609
    %v615 = vmul.f32 1.0, %v614
    %v616 = vrcp.pop %v585
    %v617 = vmul.f32 %v585, %v616
    %v618 = vsub.f32 1.0, %v617
    %v619 = vmul.f32 %v616, %v618
    %v620 = vadd.f32 %v616, %v619
    %vm621 = vweird.f32 %v585
    %vm622 = vweird.f32 %v616
    %vm623 = vmor %vm621, %vm622
    %v624 = vsel %vm623, %v616, %v620
    %v625 = vand.u32 2147483647, %v585
    %vm626 = vcmp.eq.f32.partialorder %v625, 8.507059e+37
    %v627 = vand.u32 %v585, 2147483648
    %v628 = vor.u32 1.1754944e-38, %v627
    %v629 = vsel %vm626, %v628, %v624
    %v630 = vmul.f32 1.0, %v629
    %v631 = vtanh.pop %v573
    %v632 = vmul.f32 %v615, %v477
    %v633 = vmul.f32 %v600, %v631
    %v634 = vadd.f32 %v632, %v633
    %v635 = vtanh.pop %v634
    %v636 = vmul.f32 %v630, %v635
    %v637 = vperm.slane %v312, 1
    %v638 = vmul.f32 %v636, %v637
    %v639 = vadd.f32 %v482, %v638
    %v640 = vld [vmem:[#allocation2 + $0x40] sm:$0xff]
    %v641 = vld [vmem:[#allocation2 + $0x48] sm:$0xff]
    %v642 = vld [vmem:[#allocation2 + $0x50] sm:$0xff]
    %v643 = vld [vmem:[#allocation2 + $0x58] sm:$0xff]
    %v645 = vsel %vm317, %v636, 0
    %647 = vmatpush.msra.mxu0 0.0
    %648 = vmatpush.msra.mxu0 0.0
    %649 = vmatpush.msra.mxu0 0.0
    %650 = vmatpush.msra.mxu0 0.0
    %651 = vmatpush.msra.mxu0 0.0
    %652 = vmatpush.msra.mxu0 0.0
    %653 = vmatpush.msra.mxu0 0.0
    %654 = vmatpush.msra.mxu0 0.0
    %655 = vmatpush.msra.mxu0 0.0
    %656 = vmatpush.msra.mxu0 0.0
    %657 = vmatpush.msra.mxu0 0.0
    %658 = vmatpush.msra.mxu0 0.0
    %659 = vmatpush.msra.mxu0 0.0
    %660 = vmatpush.msra.mxu0 %v322
    %661 = vmatpush.msra.mxu0 %v304
    %662 = vmatpush.msra.mxu0 %v300
    %663 = vmatmul.f32.gmra.mxu0 %v645
    %v664 = vpop.f32.mrf.mxu0
    %v665 = vadd.f32 0.0, %v664
    %666 = vdwg.mxu0
    %667 = vmatpush.msra.mxu0 0.0
    %668 = vmatpush.msra.mxu0 0.0
    %669 = vmatpush.msra.mxu0 0.0
    %670 = vmatpush.msra.mxu0 0.0
    %671 = vmatpush.msra.mxu0 0.0
    %672 = vmatpush.msra.mxu0 0.0
    %673 = vmatpush.msra.mxu0 0.0
    %674 = vmatpush.msra.mxu0 0.0
    %675 = vmatpush.msra.mxu0 0.0
    %676 = vmatpush.msra.mxu0 0.0
    %677 = vmatpush.msra.mxu0 0.0
    %678 = vmatpush.msra.mxu0 0.0
    %679 = vmatpush.msra.mxu0 0.0
    %680 = vmatpush.msra.mxu0 %v325
    %681 = vmatpush.msra.mxu0 %v305
    %682 = vmatpush.msra.mxu0 %v301
    %683 = vmatmul.f32.gmra.mxu0 %v645
    %v684 = vpop.f32.mrf.mxu0
    %v685 = vadd.f32 0.0, %v684
    %686 = vdwg.mxu0
    %687 = vmatpush.msra.mxu0 0.0
    %688 = vmatpush.msra.mxu0 0.0
    %689 = vmatpush.msra.mxu0 0.0
    %690 = vmatpush.msra.mxu0 0.0
    %691 = vmatpush.msra.mxu0 0.0
    %692 = vmatpush.msra.mxu0 0.0
    %693 = vmatpush.msra.mxu0 0.0
    %694 = vmatpush.msra.mxu0 0.0
    %695 = vmatpush.msra.mxu0 0.0
    %696 = vmatpush.msra.mxu0 0.0
    %697 = vmatpush.msra.mxu0 0.0
    %698 = vmatpush.msra.mxu0 0.0
    %699 = vmatpush.msra.mxu0 0.0
    %700 = vmatpush.msra.mxu0 %v328
    %701 = vmatpush.msra.mxu0 %v306
    %702 = vmatpush.msra.mxu0 %v302
    %703 = vmatmul.f32.gmra.mxu0 %v645
    %v704 = vpop.f32.mrf.mxu0
    %v705 = vadd.f32 0.0, %v704
    %706 = vdwg.mxu0
    %707 = vmatpush.msra.mxu0 0.0
    %708 = vmatpush.msra.mxu0 0.0
    %709 = vmatpush.msra.mxu0 0.0
    %710 = vmatpush.msra.mxu0 0.0
    %711 = vmatpush.msra.mxu0 0.0
    %712 = vmatpush.msra.mxu0 0.0
    %713 = vmatpush.msra.mxu0 0.0
    %714 = vmatpush.msra.mxu0 0.0
    %715 = vmatpush.msra.mxu0 0.0
    %716 = vmatpush.msra.mxu0 0.0
    %717 = vmatpush.msra.mxu0 0.0
    %718 = vmatpush.msra.mxu0 0.0
    %719 = vmatpush.msra.mxu0 0.0
    %720 = vmatpush.msra.mxu0 %v331
    %721 = vmatpush.msra.mxu0 %v307
    %722 = vmatpush.msra.mxu0 %v303
    %723 = vmatmul.f32.gmra.mxu0 %v645
    %v724 = vpop.f32.mrf.mxu0
    %v725 = vadd.f32 0.0, %v724
    %726 = vdwg.mxu0
    %v727 = vadd.f32 %v640, %v665
    %v728 = vadd.f32 %v641, %v685
    %v729 = vadd.f32 %v642, %v705
    %v730 = vadd.f32 %v643, %v725
    %v731 = vxor.u32 %v727, 2147483648
    %v732 = vxor.u32 %v728, 2147483648
    %v733 = vxor.u32 %v729, 2147483648
    %v734 = vmul.f32 %v731, 1.442695
    %v735 = vpow.pop %v734
    %v736 = vmul.f32 %v732, 1.442695
    %v737 = vpow.pop %v736
    %v738 = vmul.f32 %v733, 1.442695
    %v739 = vpow.pop %v738
    %v740 = vadd.f32 %v735, 1.0
    %v741 = vadd.f32 %v737, 1.0
    %v742 = vadd.f32 %v739, 1.0
    %v743 = vrcp.pop %v740
    %v744 = vmul.f32 %v740, %v743
    %v745 = vsub.f32 1.0, %v744
    %v746 = vmul.f32 %v743, %v745
    %v747 = vadd.f32 %v743, %v746
    %vm748 = vweird.f32 %v740
    %vm749 = vweird.f32 %v743
    %vm750 = vmor %vm748, %vm749
    %v751 = vsel %vm750, %v743, %v747
    %v752 = vand.u32 2147483647, %v740
    %vm753 = vcmp.eq.f32.partialorder %v752, 8.507059e+37
    %v754 = vand.u32 %v740, 2147483648
    %v755 = vor.u32 1.1754944e-38, %v754
    %v756 = vsel %vm753, %v755, %v751
    %v757 = vmul.f32 1.0, %v756
    %v758 = vrcp.pop %v741
    %v759 = vmul.f32 %v741, %v758
    %v760 = vsub.f32 1.0, %v759
    %v761 = vmul.f32 %v758, %v760
    %v762 = vadd.f32 %v758, %v761
    %vm763 = vweird.f32 %v741
    %vm764 = vweird.f32 %v758
    %vm765 = vmor %vm763, %vm764
    %v766 = vsel %vm765, %v758, %v762
    %v767 = vand.u32 2147483647, %v741
    %vm768 = vcmp.eq.f32.partialorder %v767, 8.507059e+37
    %v769 = vand.u32 %v741, 2147483648
    %v770 = vor.u32 1.1754944e-38, %v769
    %v771 = vsel %vm768, %v770, %v766
    %v772 = vmul.f32 1.0, %v771
    %v773 = vrcp.pop %v742
    %v774 = vmul.f32 %v742, %v773
    %v775 = vsub.f32 1.0, %v774
    %v776 = vmul.f32 %v773, %v775
    %v777 = vadd.f32 %v773, %v776
    %vm778 = vweird.f32 %v742
    %vm779 = vweird.f32 %v773
    %vm780 = vmor %vm778, %vm779
    %v781 = vsel %vm780, %v773, %v777
    %v782 = vand.u32 2147483647, %v742
    %vm783 = vcmp.eq.f32.partialorder %v782, 8.507059e+37
    %v784 = vand.u32 %v742, 2147483648
    %v785 = vor.u32 1.1754944e-38, %v784
    %v786 = vsel %vm783, %v785, %v781
    %v787 = vmul.f32 1.0, %v786
    %v788 = vtanh.pop %v730
    %v789 = vmul.f32 %v772, %v634
    %v790 = vmul.f32 %v757, %v788
    %v791 = vadd.f32 %v789, %v790
    %v792 = vtanh.pop %v791
    %v793 = vmul.f32 %v787, %v792
    %v794 = vperm.slane %v312, 2
    %v795 = vmul.f32 %v793, %v794
    %v796 = vadd.f32 %v639, %v795
    %v797 = vld [vmem:[#allocation2 + $0x60] sm:$0xff]
    %v798 = vld [vmem:[#allocation2 + $0x68] sm:$0xff]
    %v799 = vld [vmem:[#allocation2 + $0x70] sm:$0xff]
    %v800 = vld [vmem:[#allocation2 + $0x78] sm:$0xff]
    %v802 = vsel %vm317, %v793, 0
    %804 = vmatpush.msra.mxu0 0.0
    %805 = vmatpush.msra.mxu0 0.0
    %806 = vmatpush.msra.mxu0 0.0
    %807 = vmatpush.msra.mxu0 0.0
    %808 = vmatpush.msra.mxu0 0.0
    %809 = vmatpush.msra.mxu0 0.0
    %810 = vmatpush.msra.mxu0 0.0
    %811 = vmatpush.msra.mxu0 0.0
    %812 = vmatpush.msra.mxu0 0.0
    %813 = vmatpush.msra.mxu0 0.0
    %814 = vmatpush.msra.mxu0 0.0
    %815 = vmatpush.msra.mxu0 0.0
    %816 = vmatpush.msra.mxu0 0.0
    %817 = vmatpush.msra.mxu0 %v322
    %818 = vmatpush.msra.mxu0 %v304
    %819 = vmatpush.msra.mxu0 %v300
    %820 = vmatmul.f32.gmra.mxu0 %v802
    %v821 = vpop.f32.mrf.mxu0
    %v822 = vadd.f32 0.0, %v821
    %823 = vdwg.mxu0
    %824 = vmatpush.msra.mxu0 0.0
    %825 = vmatpush.msra.mxu0 0.0
    %826 = vmatpush.msra.mxu0 0.0
    %827 = vmatpush.msra.mxu0 0.0
    %828 = vmatpush.msra.mxu0 0.0
    %829 = vmatpush.msra.mxu0 0.0
    %830 = vmatpush.msra.mxu0 0.0
    %831 = vmatpush.msra.mxu0 0.0
    %832 = vmatpush.msra.mxu0 0.0
    %833 = vmatpush.msra.mxu0 0.0
    %834 = vmatpush.msra.mxu0 0.0
    %835 = vmatpush.msra.mxu0 0.0
    %836 = vmatpush.msra.mxu0 0.0
    %837 = vmatpush.msra.mxu0 %v325
    %838 = vmatpush.msra.mxu0 %v305
    %839 = vmatpush.msra.mxu0 %v301
    %840 = vmatmul.f32.gmra.mxu0 %v802
    %v841 = vpop.f32.mrf.mxu0
    %v842 = vadd.f32 0.0, %v841
    %843 = vdwg.mxu0
    %844 = vmatpush.msra.mxu0 0.0
    %845 = vmatpush.msra.mxu0 0.0
    %846 = vmatpush.msra.mxu0 0.0
    %847 = vmatpush.msra.mxu0 0.0
    %848 = vmatpush.msra.mxu0 0.0
    %849 = vmatpush.msra.mxu0 0.0
    %850 = vmatpush.msra.mxu0 0.0
    %851 = vmatpush.msra.mxu0 0.0
    %852 = vmatpush.msra.mxu0 0.0
    %853 = vmatpush.msra.mxu0 0.0
    %854 = vmatpush.msra.mxu0 0.0
    %855 = vmatpush.msra.mxu0 0.0
    %856 = vmatpush.msra.mxu0 0.0
    %857 = vmatpush.msra.mxu0 %v328
    %858 = vmatpush.msra.mxu0 %v306
    %859 = vmatpush.msra.mxu0 %v302
    %860 = vmatmul.f32.gmra.mxu0 %v802
    %v861 = vpop.f32.mrf.mxu0
    %v862 = vadd.f32 0.0, %v861
    %863 = vdwg.mxu0
    %864 = vmatpush.msra.mxu0 0.0
    %865 = vmatpush.msra.mxu0 0.0
    %866 = vmatpush.msra.mxu0 0.0
    %867 = vmatpush.msra.mxu0 0.0
    %868 = vmatpush.msra.mxu0 0.0
    %869 = vmatpush.msra.mxu0 0.0
    %870 = vmatpush.msra.mxu0 0.0
    %871 = vmatpush.msra.mxu0 0.0
    %872 = vmatpush.msra.mxu0 0.0
    %873 = vmatpush.msra.mxu0 0.0
    %874 = vmatpush.msra.mxu0 0.0
    %875 = vmatpush.msra.mxu0 0.0
    %876 = vmatpush.msra.mxu0 0.0
    %877 = vmatpush.msra.mxu0 %v331
    %878 = vmatpush.msra.mxu0 %v307
    %879 = vmatpush.msra.mxu0 %v303
    %880 = vmatmul.f32.gmra.mxu0 %v802
    %v881 = vpop.f32.mrf.mxu0
    %v882 = vadd.f32 0.0, %v881
    %883 = vdwg.mxu0
    %v884 = vadd.f32 %v797, %v822
    %v885 = vadd.f32 %v798, %v842
    %v886 = vadd.f32 %v799, %v862
    %v887 = vadd.f32 %v800, %v882
    %v888 = vxor.u32 %v884, 2147483648
    %v889 = vxor.u32 %v885, 2147483648
    %v890 = vxor.u32 %v886, 2147483648
    %v891 = vmul.f32 %v888, 1.442695
    %v892 = vpow.pop %v891
    %v893 = vmul.f32 %v889, 1.442695
    %v894 = vpow.pop %v893
    %v895 = vmul.f32 %v890, 1.442695
    %v896 = vpow.pop %v895
    %v897 = vadd.f32 %v892, 1.0
    %v898 = vadd.f32 %v894, 1.0
    %v899 = vadd.f32 %v896, 1.0
    %v900 = vrcp.pop %v897
    %v901 = vmul.f32 %v897, %v900
    %v902 = vsub.f32 1.0, %v901
    %v903 = vmul.f32 %v900, %v902
    %v904 = vadd.f32 %v900, %v903
    %vm905 = vweird.f32 %v897
    %vm906 = vweird.f32 %v900
    %vm907 = vmor %vm905, %vm906
    %v908 = vsel %vm907, %v900, %v904
    %v909 = vand.u32 2147483647, %v897
    %vm910 = vcmp.eq.f32.partialorder %v909, 8.507059e+37
    %v911 = vand.u32 %v897, 2147483648
    %v912 = vor.u32 1.1754944e-38, %v911
    %v913 = vsel %vm910, %v912, %v908
    %v914 = vmul.f32 1.0, %v913
    %v915 = vrcp.pop %v898
    %v916 = vmul.f32 %v898, %v915
    %v917 = vsub.f32 1.0, %v916
    %v918 = vmul.f32 %v915, %v917
    %v919 = vadd.f32 %v915, %v918
    %vm920 = vweird.f32 %v898
    %vm921 = vweird.f32 %v915
    %vm922 = vmor %vm920, %vm921
    %v923 = vsel %vm922, %v915, %v919
    %v924 = vand.u32 2147483647, %v898
    %vm925 = vcmp.eq.f32.partialorder %v924, 8.507059e+37
    %v926 = vand.u32 %v898, 2147483648
    %v927 = vor.u32 1.1754944e-38, %v926
    %v928 = vsel %vm925, %v927, %v923
    %v929 = vmul.f32 1.0, %v928
    %v930 = vrcp.pop %v899
    %v931 = vmul.f32 %v899, %v930
    %v932 = vsub.f32 1.0, %v931
    %v933 = vmul.f32 %v930, %v932
    %v934 = vadd.f32 %v930, %v933
    %vm935 = vweird.f32 %v899
    %vm936 = vweird.f32 %v930
    %vm937 = vmor %vm935, %vm936
    %v938 = vsel %vm937, %v930, %v934
    %v939 = vand.u32 2147483647, %v899
    %vm940 = vcmp.eq.f32.partialorder %v939, 8.507059e+37
    %v941 = vand.u32 %v899, 2147483648
    %v942 = vor.u32 1.1754944e-38, %v941
    %v943 = vsel %vm940, %v942, %v938
    %v944 = vmul.f32 1.0, %v943
    %v945 = vtanh.pop %v887
    %v946 = vmul.f32 %v929, %v791
    %v947 = vmul.f32 %v914, %v945
    %v948 = vadd.f32 %v946, %v947
    %v949 = vtanh.pop %v948
    %v950 = vmul.f32 %v944, %v949
    %v951 = vperm.slane %v312, 3
    %v952 = vmul.f32 %v950, %v951
    %v953 = vadd.f32 %v796, %v952
    %v954 = vld [vmem:[#allocation2 + $0x80] sm:$0xff]
    %v955 = vld [vmem:[#allocation2 + $0x88] sm:$0xff]
    %v956 = vld [vmem:[#allocation2 + $0x90] sm:$0xff]
    %v957 = vld [vmem:[#allocation2 + $0x98] sm:$0xff]
    %v959 = vsel %vm317, %v950, 0
    %961 = vmatpush.msra.mxu0 0.0
    %962 = vmatpush.msra.mxu0 0.0
    %963 = vmatpush.msra.mxu0 0.0
    %964 = vmatpush.msra.mxu0 0.0
    %965 = vmatpush.msra.mxu0 0.0
    %966 = vmatpush.msra.mxu0 0.0
    %967 = vmatpush.msra.mxu0 0.0
    %968 = vmatpush.msra.mxu0 0.0
    %969 = vmatpush.msra.mxu0 0.0
    %970 = vmatpush.msra.mxu0 0.0
    %971 = vmatpush.msra.mxu0 0.0
    %972 = vmatpush.msra.mxu0 0.0
    %973 = vmatpush.msra.mxu0 0.0
    %974 = vmatpush.msra.mxu0 %v322
    %975 = vmatpush.msra.mxu0 %v304
    %976 = vmatpush.msra.mxu0 %v300
    %977 = vmatmul.f32.gmra.mxu0 %v959
    %v978 = vpop.f32.mrf.mxu0
    %v979 = vadd.f32 0.0, %v978
    %980 = vdwg.mxu0
    %981 = vmatpush.msra.mxu0 0.0
    %982 = vmatpush.msra.mxu0 0.0
    %983 = vmatpush.msra.mxu0 0.0
    %984 = vmatpush.msra.mxu0 0.0
    %985 = vmatpush.msra.mxu0 0.0
    %986 = vmatpush.msra.mxu0 0.0
    %987 = vmatpush.msra.mxu0 0.0
    %988 = vmatpush.msra.mxu0 0.0
    %989 = vmatpush.msra.mxu0 0.0
    %990 = vmatpush.msra.mxu0 0.0
    %991 = vmatpush.msra.mxu0 0.0
    %992 = vmatpush.msra.mxu0 0.0
    %993 = vmatpush.msra.mxu0 0.0
    %994 = vmatpush.msra.mxu0 %v325
    %995 = vmatpush.msra.mxu0 %v305
    %996 = vmatpush.msra.mxu0 %v301
    %997 = vmatmul.f32.gmra.mxu0 %v959
    %v998 = vpop.f32.mrf.mxu0
    %v999 = vadd.f32 0.0, %v998
    %1000 = vdwg.mxu0
    %1001 = vmatpush.msra.mxu0 0.0
    %1002 = vmatpush.msra.mxu0 0.0
    %1003 = vmatpush.msra.mxu0 0.0
    %1004 = vmatpush.msra.mxu0 0.0
    %1005 = vmatpush.msra.mxu0 0.0
    %1006 = vmatpush.msra.mxu0 0.0
    %1007 = vmatpush.msra.mxu0 0.0
    %1008 = vmatpush.msra.mxu0 0.0
    %1009 = vmatpush.msra.mxu0 0.0
    %1010 = vmatpush.msra.mxu0 0.0
    %1011 = vmatpush.msra.mxu0 0.0
    %1012 = vmatpush.msra.mxu0 0.0
    %1013 = vmatpush.msra.mxu0 0.0
    %1014 = vmatpush.msra.mxu0 %v328
    %1015 = vmatpush.msra.mxu0 %v306
    %1016 = vmatpush.msra.mxu0 %v302
    %1017 = vmatmul.f32.gmra.mxu0 %v959
    %v1018 = vpop.f32.mrf.mxu0
    %v1019 = vadd.f32 0.0, %v1018
    %1020 = vdwg.mxu0
    %1021 = vmatpush.msra.mxu0 0.0
    %1022 = vmatpush.msra.mxu0 0.0
    %1023 = vmatpush.msra.mxu0 0.0
    %1024 = vmatpush.msra.mxu0 0.0
    %1025 = vmatpush.msra.mxu0 0.0
    %1026 = vmatpush.msra.mxu0 0.0
    %1027 = vmatpush.msra.mxu0 0.0
    %1028 = vmatpush.msra.mxu0 0.0
    %1029 = vmatpush.msra.mxu0 0.0
    %1030 = vmatpush.msra.mxu0 0.0
    %1031 = vmatpush.msra.mxu0 0.0
    %1032 = vmatpush.msra.mxu0 0.0
    %1033 = vmatpush.msra.mxu0 0.0
    %1034 = vmatpush.msra.mxu0 %v331
    %1035 = vmatpush.msra.mxu0 %v307
    %1036 = vmatpush.msra.mxu0 %v303
    %1037 = vmatmul.f32.gmra.mxu0 %v959
    %v1038 = vpop.f32.mrf.mxu0
    %v1039 = vadd.f32 0.0, %v1038
    %1040 = vdwg.mxu0
    %v1041 = vadd.f32 %v954, %v979
    %v1042 = vadd.f32 %v955, %v999
    %v1043 = vadd.f32 %v956, %v1019
    %v1044 = vadd.f32 %v957, %v1039
    %v1045 = vxor.u32 %v1041, 2147483648
    %v1046 = vxor.u32 %v1042, 2147483648
    %v1047 = vxor.u32 %v1043, 2147483648
    %v1048 = vmul.f32 %v1045, 1.442695
    %v1049 = vpow.pop %v1048
    %v1050 = vmul.f32 %v1046, 1.442695
    %v1051 = vpow.pop %v1050
    %v1052 = vmul.f32 %v1047, 1.442695
    %v1053 = vpow.pop %v1052
    %v1054 = vadd.f32 %v1049, 1.0
    %v1055 = vadd.f32 %v1051, 1.0
    %v1056 = vadd.f32 %v1053, 1.0
    %v1057 = vrcp.pop %v1054
    %v1058 = vmul.f32 %v1054, %v1057
    %v1059 = vsub.f32 1.0, %v1058
    %v1060 = vmul.f32 %v1057, %v1059
    %v1061 = vadd.f32 %v1057, %v1060
    %vm1062 = vweird.f32 %v1054
    %vm1063 = vweird.f32 %v1057
    %vm1064 = vmor %vm1062, %vm1063
    %v1065 = vsel %vm1064, %v1057, %v1061
    %v1066 = vand.u32 2147483647, %v1054
    %vm1067 = vcmp.eq.f32.partialorder %v1066, 8.507059e+37
    %v1068 = vand.u32 %v1054, 2147483648
    %v1069 = vor.u32 1.1754944e-38, %v1068
    %v1070 = vsel %vm1067, %v1069, %v1065
    %v1071 = vmul.f32 1.0, %v1070
    %v1072 = vrcp.pop %v1055
    %v1073 = vmul.f32 %v1055, %v1072
    %v1074 = vsub.f32 1.0, %v1073
    %v1075 = vmul.f32 %v1072, %v1074
    %v1076 = vadd.f32 %v1072, %v1075
    %vm1077 = vweird.f32 %v1055
    %vm1078 = vweird.f32 %v1072
    %vm1079 = vmor %vm1077, %vm1078
    %v1080 = vsel %vm1079, %v1072, %v1076
    %v1081 = vand.u32 2147483647, %v1055
    %vm1082 = vcmp.eq.f32.partialorder %v1081, 8.507059e+37
    %v1083 = vand.u32 %v1055, 2147483648
    %v1084 = vor.u32 1.1754944e-38, %v1083
    %v1085 = vsel %vm1082, %v1084, %v1080
    %v1086 = vmul.f32 1.0, %v1085
    %v1087 = vrcp.pop %v1056
    %v1088 = vmul.f32 %v1056, %v1087
    %v1089 = vsub.f32 1.0, %v1088
    %v1090 = vmul.f32 %v1087, %v1089
    %v1091 = vadd.f32 %v1087, %v1090
    %vm1092 = vweird.f32 %v1056
    %vm1093 = vweird.f32 %v1087
    %vm1094 = vmor %vm1092, %vm1093
    %v1095 = vsel %vm1094, %v1087, %v1091
    %v1096 = vand.u32 2147483647, %v1056
    %vm1097 = vcmp.eq.f32.partialorder %v1096, 8.507059e+37
    %v1098 = vand.u32 %v1056, 2147483648
    %v1099 = vor.u32 1.1754944e-38, %v1098
    %v1100 = vsel %vm1097, %v1099, %v1095
    %v1101 = vmul.f32 1.0, %v1100
    %v1102 = vtanh.pop %v1044
    %v1103 = vmul.f32 %v1086, %v948
    %v1104 = vmul.f32 %v1071, %v1102
    %v1105 = vadd.f32 %v1103, %v1104
    %v1106 = vtanh.pop %v1105
    %v1107 = vmul.f32 %v1101, %v1106
    %v1108 = vperm.slane %v312, 4
    %v1109 = vmul.f32 %v1107, %v1108
    %v1110 = vadd.f32 %v953, %v1109
    %v1111 = vld [vmem:[#allocation2 + $0xa0] sm:$0xff]
    %v1112 = vld [vmem:[#allocation2 + $0xa8] sm:$0xff]
    %v1113 = vld [vmem:[#allocation2 + $0xb0] sm:$0xff]
    %v1114 = vld [vmem:[#allocation2 + $0xb8] sm:$0xff]
    %v1116 = vsel %vm317, %v1107, 0
    %1118 = vmatpush.msra.mxu0 0.0
    %1119 = vmatpush.msra.mxu0 0.0
    %1120 = vmatpush.msra.mxu0 0.0
    %1121 = vmatpush.msra.mxu0 0.0
    %1122 = vmatpush.msra.mxu0 0.0
    %1123 = vmatpush.msra.mxu0 0.0
    %1124 = vmatpush.msra.mxu0 0.0
    %1125 = vmatpush.msra.mxu0 0.0
    %1126 = vmatpush.msra.mxu0 0.0
    %1127 = vmatpush.msra.mxu0 0.0
    %1128 = vmatpush.msra.mxu0 0.0
    %1129 = vmatpush.msra.mxu0 0.0
    %1130 = vmatpush.msra.mxu0 0.0
    %1131 = vmatpush.msra.mxu0 %v322
    %1132 = vmatpush.msra.mxu0 %v304
    %1133 = vmatpush.msra.mxu0 %v300
    %1134 = vmatmul.f32.gmra.mxu0 %v1116
    %v1135 = vpop.f32.mrf.mxu0
    %v1136 = vadd.f32 0.0, %v1135
    %1137 = vdwg.mxu0
    %1138 = vmatpush.msra.mxu0 0.0
    %1139 = vmatpush.msra.mxu0 0.0
    %1140 = vmatpush.msra.mxu0 0.0
    %1141 = vmatpush.msra.mxu0 0.0
    %1142 = vmatpush.msra.mxu0 0.0
    %1143 = vmatpush.msra.mxu0 0.0
    %1144 = vmatpush.msra.mxu0 0.0
    %1145 = vmatpush.msra.mxu0 0.0
    %1146 = vmatpush.msra.mxu0 0.0
    %1147 = vmatpush.msra.mxu0 0.0
    %1148 = vmatpush.msra.mxu0 0.0
    %1149 = vmatpush.msra.mxu0 0.0
    %1150 = vmatpush.msra.mxu0 0.0
    %1151 = vmatpush.msra.mxu0 %v325
    %1152 = vmatpush.msra.mxu0 %v305
    %1153 = vmatpush.msra.mxu0 %v301
    %1154 = vmatmul.f32.gmra.mxu0 %v1116
    %v1155 = vpop.f32.mrf.mxu0
    %v1156 = vadd.f32 0.0, %v1155
    %1157 = vdwg.mxu0
    %1158 = vmatpush.msra.mxu0 0.0
    %1159 = vmatpush.msra.mxu0 0.0
    %1160 = vmatpush.msra.mxu0 0.0
    %1161 = vmatpush.msra.mxu0 0.0
    %1162 = vmatpush.msra.mxu0 0.0
    %1163 = vmatpush.msra.mxu0 0.0
    %1164 = vmatpush.msra.mxu0 0.0
    %1165 = vmatpush.msra.mxu0 0.0
    %1166 = vmatpush.msra.mxu0 0.0
    %1167 = vmatpush.msra.mxu0 0.0
    %1168 = vmatpush.msra.mxu0 0.0
    %1169 = vmatpush.msra.mxu0 0.0
    %1170 = vmatpush.msra.mxu0 0.0
    %1171 = vmatpush.msra.mxu0 %v328
    %1172 = vmatpush.msra.mxu0 %v306
    %1173 = vmatpush.msra.mxu0 %v302
    %1174 = vmatmul.f32.gmra.mxu0 %v1116
    %v1175 = vpop.f32.mrf.mxu0
    %v1176 = vadd.f32 0.0, %v1175
    %1177 = vdwg.mxu0
    %1178 = vmatpush.msra.mxu0 0.0
    %1179 = vmatpush.msra.mxu0 0.0
    %1180 = vmatpush.msra.mxu0 0.0
    %1181 = vmatpush.msra.mxu0 0.0
    %1182 = vmatpush.msra.mxu0 0.0
    %1183 = vmatpush.msra.mxu0 0.0
    %1184 = vmatpush.msra.mxu0 0.0
    %1185 = vmatpush.msra.mxu0 0.0
    %1186 = vmatpush.msra.mxu0 0.0
    %1187 = vmatpush.msra.mxu0 0.0
    %1188 = vmatpush.msra.mxu0 0.0
    %1189 = vmatpush.msra.mxu0 0.0
    %1190 = vmatpush.msra.mxu0 0.0
    %1191 = vmatpush.msra.mxu0 %v331
    %1192 = vmatpush.msra.mxu0 %v307
    %1193 = vmatpush.msra.mxu0 %v303
    %1194 = vmatmul.f32.gmra.mxu0 %v1116
    %v1195 = vpop.f32.mrf.mxu0
    %v1196 = vadd.f32 0.0, %v1195
    %1197 = vdwg.mxu0
    %v1198 = vadd.f32 %v1111, %v1136
    %v1199 = vadd.f32 %v1112, %v1156
    %v1200 = vadd.f32 %v1113, %v1176
    %v1201 = vadd.f32 %v1114, %v1196
    %v1202 = vxor.u32 %v1198, 2147483648
    %v1203 = vxor.u32 %v1199, 2147483648
    %v1204 = vxor.u32 %v1200, 2147483648
    %v1205 = vmul.f32 %v1202, 1.442695
    %v1206 = vpow.pop %v1205
    %v1207 = vmul.f32 %v1203, 1.442695
    %v1208 = vpow.pop %v1207
    %v1209 = vmul.f32 %v1204, 1.442695
    %v1210 = vpow.pop %v1209
    %v1211 = vadd.f32 %v1206, 1.0
    %v1212 = vadd.f32 %v1208, 1.0
    %v1213 = vadd.f32 %v1210, 1.0
    %v1214 = vrcp.pop %v1211
    %v1215 = vmul.f32 %v1211, %v1214
    %v1216 = vsub.f32 1.0, %v1215
    %v1217 = vmul.f32 %v1214, %v1216
    %v1218 = vadd.f32 %v1214, %v1217
    %vm1219 = vweird.f32 %v1211
    %vm1220 = vweird.f32 %v1214
    %vm1221 = vmor %vm1219, %vm1220
    %v1222 = vsel %vm1221, %v1214, %v1218
    %v1223 = vand.u32 2147483647, %v1211
    %vm1224 = vcmp.eq.f32.partialorder %v1223, 8.507059e+37
    %v1225 = vand.u32 %v1211, 2147483648
    %v1226 = vor.u32 1.1754944e-38, %v1225
    %v1227 = vsel %vm1224, %v1226, %v1222
    %v1228 = vmul.f32 1.0, %v1227
    %v1229 = vrcp.pop %v1212
    %v1230 = vmul.f32 %v1212, %v1229
    %v1231 = vsub.f32 1.0, %v1230
    %v1232 = vmul.f32 %v1229, %v1231
    %v1233 = vadd.f32 %v1229, %v1232
    %vm1234 = vweird.f32 %v1212
    %vm1235 = vweird.f32 %v1229
    %vm1236 = vmor %vm1234, %vm1235
    %v1237 = vsel %vm1236, %v1229, %v1233
    %v1238 = vand.u32 2147483647, %v1212
    %vm1239 = vcmp.eq.f32.partialorder %v1238, 8.507059e+37
    %v1240 = vand.u32 %v1212, 2147483648
    %v1241 = vor.u32 1.1754944e-38, %v1240
    %v1242 = vsel %vm1239, %v1241, %v1237
    %v1243 = vmul.f32 1.0, %v1242
    %v1244 = vrcp.pop %v1213
    %v1245 = vmul.f32 %v1213, %v1244
    %v1246 = vsub.f32 1.0, %v1245
    %v1247 = vmul.f32 %v1244, %v1246
    %v1248 = vadd.f32 %v1244, %v1247
    %vm1249 = vweird.f32 %v1213
    %vm1250 = vweird.f32 %v1244
    %vm1251 = vmor %vm1249, %vm1250
    %v1252 = vsel %vm1251, %v1244, %v1248
    %v1253 = vand.u32 2147483647, %v1213
    %vm1254 = vcmp.eq.f32.partialorder %v1253, 8.507059e+37
    %v1255 = vand.u32 %v1213, 2147483648
    %v1256 = vor.u32 1.1754944e-38, %v1255
    %v1257 = vsel %vm1254, %v1256, %v1252
    %v1258 = vmul.f32 1.0, %v1257
    %v1259 = vtanh.pop %v1201
    %v1260 = vmul.f32 %v1243, %v1105
    %v1261 = vmul.f32 %v1228, %v1259
    %v1262 = vadd.f32 %v1260, %v1261
    %v1263 = vtanh.pop %v1262
    %v1264 = vmul.f32 %v1258, %v1263
    %v1265 = vperm.slane %v312, 5
    %v1266 = vmul.f32 %v1264, %v1265
    %v1267 = vadd.f32 %v1110, %v1266
    %v1268 = vld [vmem:[#allocation2 + $0xc0] sm:$0xff]
    %v1269 = vld [vmem:[#allocation2 + $0xc8] sm:$0xff]
    %v1270 = vld [vmem:[#allocation2 + $0xd0] sm:$0xff]
    %v1271 = vld [vmem:[#allocation2 + $0xd8] sm:$0xff]
    %v1273 = vsel %vm317, %v1264, 0
    %1275 = vmatpush.msra.mxu0 0.0
    %1276 = vmatpush.msra.mxu0 0.0
    %1277 = vmatpush.msra.mxu0 0.0
    %1278 = vmatpush.msra.mxu0 0.0
    %1279 = vmatpush.msra.mxu0 0.0
    %1280 = vmatpush.msra.mxu0 0.0
    %1281 = vmatpush.msra.mxu0 0.0
    %1282 = vmatpush.msra.mxu0 0.0
    %1283 = vmatpush.msra.mxu0 0.0
    %1284 = vmatpush.msra.mxu0 0.0
    %1285 = vmatpush.msra.mxu0 0.0
    %1286 = vmatpush.msra.mxu0 0.0
    %1287 = vmatpush.msra.mxu0 0.0
    %1288 = vmatpush.msra.mxu0 %v322
    %1289 = vmatpush.msra.mxu0 %v304
    %1290 = vmatpush.msra.mxu0 %v300
    %1291 = vmatmul.f32.gmra.mxu0 %v1273
    %v1292 = vpop.f32.mrf.mxu0
    %v1293 = vadd.f32 0.0, %v1292
    %1294 = vdwg.mxu0
    %1295 = vmatpush.msra.mxu0 0.0
    %1296 = vmatpush.msra.mxu0 0.0
    %1297 = vmatpush.msra.mxu0 0.0
    %1298 = vmatpush.msra.mxu0 0.0
    %1299 = vmatpush.msra.mxu0 0.0
    %1300 = vmatpush.msra.mxu0 0.0
    %1301 = vmatpush.msra.mxu0 0.0
    %1302 = vmatpush.msra.mxu0 0.0
    %1303 = vmatpush.msra.mxu0 0.0
    %1304 = vmatpush.msra.mxu0 0.0
    %1305 = vmatpush.msra.mxu0 0.0
    %1306 = vmatpush.msra.mxu0 0.0
    %1307 = vmatpush.msra.mxu0 0.0
    %1308 = vmatpush.msra.mxu0 %v325
    %1309 = vmatpush.msra.mxu0 %v305
    %1310 = vmatpush.msra.mxu0 %v301
    %1311 = vmatmul.f32.gmra.mxu0 %v1273
    %v1312 = vpop.f32.mrf.mxu0
    %v1313 = vadd.f32 0.0, %v1312
    %1314 = vdwg.mxu0
    %1315 = vmatpush.msra.mxu0 0.0
    %1316 = vmatpush.msra.mxu0 0.0
    %1317 = vmatpush.msra.mxu0 0.0
    %1318 = vmatpush.msra.mxu0 0.0
    %1319 = vmatpush.msra.mxu0 0.0
    %1320 = vmatpush.msra.mxu0 0.0
    %1321 = vmatpush.msra.mxu0 0.0
    %1322 = vmatpush.msra.mxu0 0.0
    %1323 = vmatpush.msra.mxu0 0.0
    %1324 = vmatpush.msra.mxu0 0.0
    %1325 = vmatpush.msra.mxu0 0.0
    %1326 = vmatpush.msra.mxu0 0.0
    %1327 = vmatpush.msra.mxu0 0.0
    %1328 = vmatpush.msra.mxu0 %v328
    %1329 = vmatpush.msra.mxu0 %v306
    %1330 = vmatpush.msra.mxu0 %v302
    %1331 = vmatmul.f32.gmra.mxu0 %v1273
    %v1332 = vpop.f32.mrf.mxu0
    %v1333 = vadd.f32 0.0, %v1332
    %1334 = vdwg.mxu0
    %1335 = vmatpush.msra.mxu0 0.0
    %1336 = vmatpush.msra.mxu0 0.0
    %1337 = vmatpush.msra.mxu0 0.0
    %1338 = vmatpush.msra.mxu0 0.0
    %1339 = vmatpush.msra.mxu0 0.0
    %1340 = vmatpush.msra.mxu0 0.0
    %1341 = vmatpush.msra.mxu0 0.0
    %1342 = vmatpush.msra.mxu0 0.0
    %1343 = vmatpush.msra.mxu0 0.0
    %1344 = vmatpush.msra.mxu0 0.0
    %1345 = vmatpush.msra.mxu0 0.0
    %1346 = vmatpush.msra.mxu0 0.0
    %1347 = vmatpush.msra.mxu0 0.0
    %1348 = vmatpush.msra.mxu0 %v331
    %1349 = vmatpush.msra.mxu0 %v307
    %1350 = vmatpush.msra.mxu0 %v303
    %1351 = vmatmul.f32.gmra.mxu0 %v1273
    %v1352 = vpop.f32.mrf.mxu0
    %v1353 = vadd.f32 0.0, %v1352
    %1354 = vdwg.mxu0
    %v1355 = vadd.f32 %v1268, %v1293
    %v1356 = vadd.f32 %v1269, %v1313
    %v1357 = vadd.f32 %v1270, %v1333
    %v1358 = vadd.f32 %v1271, %v1353
    %v1359 = vxor.u32 %v1355, 2147483648
    %v1360 = vxor.u32 %v1356, 2147483648
    %v1361 = vxor.u32 %v1357, 2147483648
    %v1362 = vmul.f32 %v1359, 1.442695
    %v1363 = vpow.pop %v1362
    %v1364 = vmul.f32 %v1360, 1.442695
    %v1365 = vpow.pop %v1364
    %v1366 = vmul.f32 %v1361, 1.442695
    %v1367 = vpow.pop %v1366
    %v1368 = vadd.f32 %v1363, 1.0
    %v1369 = vadd.f32 %v1365, 1.0
    %v1370 = vadd.f32 %v1367, 1.0
    %v1371 = vrcp.pop %v1368
    %v1372 = vmul.f32 %v1368, %v1371
    %v1373 = vsub.f32 1.0, %v1372
    %v1374 = vmul.f32 %v1371, %v1373
    %v1375 = vadd.f32 %v1371, %v1374
    %vm1376 = vweird.f32 %v1368
    %vm1377 = vweird.f32 %v1371
    %vm1378 = vmor %vm1376, %vm1377
    %v1379 = vsel %vm1378, %v1371, %v1375
    %v1380 = vand.u32 2147483647, %v1368
    %vm1381 = vcmp.eq.f32.partialorder %v1380, 8.507059e+37
    %v1382 = vand.u32 %v1368, 2147483648
    %v1383 = vor.u32 1.1754944e-38, %v1382
    %v1384 = vsel %vm1381, %v1383, %v1379
    %v1385 = vmul.f32 1.0, %v1384
    %v1386 = vrcp.pop %v1369
    %v1387 = vmul.f32 %v1369, %v1386
    %v1388 = vsub.f32 1.0, %v1387
    %v1389 = vmul.f32 %v1386, %v1388
    %v1390 = vadd.f32 %v1386, %v1389
    %vm1391 = vweird.f32 %v1369
    %vm1392 = vweird.f32 %v1386
    %vm1393 = vmor %vm1391, %vm1392
    %v1394 = vsel %vm1393, %v1386, %v1390
    %v1395 = vand.u32 2147483647, %v1369
    %vm1396 = vcmp.eq.f32.partialorder %v1395, 8.507059e+37
    %v1397 = vand.u32 %v1369, 2147483648
    %v1398 = vor.u32 1.1754944e-38, %v1397
    %v1399 = vsel %vm1396, %v1398, %v1394
    %v1400 = vmul.f32 1.0, %v1399
    %v1401 = vrcp.pop %v1370
    %v1402 = vmul.f32 %v1370, %v1401
    %v1403 = vsub.f32 1.0, %v1402
    %v1404 = vmul.f32 %v1401, %v1403
    %v1405 = vadd.f32 %v1401, %v1404
    %vm1406 = vweird.f32 %v1370
    %vm1407 = vweird.f32 %v1401
    %vm1408 = vmor %vm1406, %vm1407
    %v1409 = vsel %vm1408, %v1401, %v1405
    %v1410 = vand.u32 2147483647, %v1370
    %vm1411 = vcmp.eq.f32.partialorder %v1410, 8.507059e+37
    %v1412 = vand.u32 %v1370, 2147483648
    %v1413 = vor.u32 1.1754944e-38, %v1412
    %v1414 = vsel %vm1411, %v1413, %v1409
    %v1415 = vmul.f32 1.0, %v1414
    %v1416 = vtanh.pop %v1358
    %v1417 = vmul.f32 %v1400, %v1262
    %v1418 = vmul.f32 %v1385, %v1416
    %v1419 = vadd.f32 %v1417, %v1418
    %v1420 = vtanh.pop %v1419
    %v1421 = vmul.f32 %v1415, %v1420
    %v1422 = vperm.slane %v312, 6
    %v1423 = vmul.f32 %v1421, %v1422
    %v1424 = vadd.f32 %v1267, %v1423
    %v1425 = vld [vmem:[#allocation2 + $0xe0] sm:$0xff]
    %v1426 = vld [vmem:[#allocation2 + $0xe8] sm:$0xff]
    %v1427 = vld [vmem:[#allocation2 + $0xf0] sm:$0xff]
    %v1428 = vld [vmem:[#allocation2 + $0xf8] sm:$0xff]
    %v1430 = vsel %vm317, %v1421, 0
    %1432 = vmatpush.msra.mxu0 0.0
    %1433 = vmatpush.msra.mxu0 0.0
    %1434 = vmatpush.msra.mxu0 0.0
    %1435 = vmatpush.msra.mxu0 0.0
    %1436 = vmatpush.msra.mxu0 0.0
    %1437 = vmatpush.msra.mxu0 0.0
    %1438 = vmatpush.msra.mxu0 0.0
    %1439 = vmatpush.msra.mxu0 0.0
    %1440 = vmatpush.msra.mxu0 0.0
    %1441 = vmatpush.msra.mxu0 0.0
    %1442 = vmatpush.msra.mxu0 0.0
    %1443 = vmatpush.msra.mxu0 0.0
    %1444 = vmatpush.msra.mxu0 0.0
    %1445 = vmatpush.msra.mxu0 %v322
    %1446 = vmatpush.msra.mxu0 %v304
    %1447 = vmatpush.msra.mxu0 %v300
    %1448 = vmatmul.f32.gmra.mxu0 %v1430
    %v1449 = vpop.f32.mrf.mxu0
    %v1450 = vadd.f32 0.0, %v1449
    %1451 = vdwg.mxu0
    %1452 = vmatpush.msra.mxu0 0.0
    %1453 = vmatpush.msra.mxu0 0.0
    %1454 = vmatpush.msra.mxu0 0.0
    %1455 = vmatpush.msra.mxu0 0.0
    %1456 = vmatpush.msra.mxu0 0.0
    %1457 = vmatpush.msra.mxu0 0.0
    %1458 = vmatpush.msra.mxu0 0.0
    %1459 = vmatpush.msra.mxu0 0.0
    %1460 = vmatpush.msra.mxu0 0.0
    %1461 = vmatpush.msra.mxu0 0.0
    %1462 = vmatpush.msra.mxu0 0.0
    %1463 = vmatpush.msra.mxu0 0.0
    %1464 = vmatpush.msra.mxu0 0.0
    %1465 = vmatpush.msra.mxu0 %v325
    %1466 = vmatpush.msra.mxu0 %v305
    %1467 = vmatpush.msra.mxu0 %v301
    %1468 = vmatmul.f32.gmra.mxu0 %v1430
    %v1469 = vpop.f32.mrf.mxu0
    %v1470 = vadd.f32 0.0, %v1469
    %1471 = vdwg.mxu0
    %1472 = vmatpush.msra.mxu0 0.0
    %1473 = vmatpush.msra.mxu0 0.0
    %1474 = vmatpush.msra.mxu0 0.0
    %1475 = vmatpush.msra.mxu0 0.0
    %1476 = vmatpush.msra.mxu0 0.0
    %1477 = vmatpush.msra.mxu0 0.0
    %1478 = vmatpush.msra.mxu0 0.0
    %1479 = vmatpush.msra.mxu0 0.0
    %1480 = vmatpush.msra.mxu0 0.0
    %1481 = vmatpush.msra.mxu0 0.0
    %1482 = vmatpush.msra.mxu0 0.0
    %1483 = vmatpush.msra.mxu0 0.0
    %1484 = vmatpush.msra.mxu0 0.0
    %1485 = vmatpush.msra.mxu0 %v328
    %1486 = vmatpush.msra.mxu0 %v306
    %1487 = vmatpush.msra.mxu0 %v302
    %1488 = vmatmul.f32.gmra.mxu0 %v1430
    %v1489 = vpop.f32.mrf.mxu0
    %v1490 = vadd.f32 0.0, %v1489
    %1491 = vdwg.mxu0
    %1492 = vmatpush.msra.mxu0 0.0
    %1493 = vmatpush.msra.mxu0 0.0
    %1494 = vmatpush.msra.mxu0 0.0
    %1495 = vmatpush.msra.mxu0 0.0
    %1496 = vmatpush.msra.mxu0 0.0
    %1497 = vmatpush.msra.mxu0 0.0
    %1498 = vmatpush.msra.mxu0 0.0
    %1499 = vmatpush.msra.mxu0 0.0
    %1500 = vmatpush.msra.mxu0 0.0
    %1501 = vmatpush.msra.mxu0 0.0
    %1502 = vmatpush.msra.mxu0 0.0
    %1503 = vmatpush.msra.mxu0 0.0
    %1504 = vmatpush.msra.mxu0 0.0
    %1505 = vmatpush.msra.mxu0 %v331
    %1506 = vmatpush.msra.mxu0 %v307
    %1507 = vmatpush.msra.mxu0 %v303
    %1508 = vmatmul.f32.gmra.mxu0 %v1430
    %v1509 = vpop.f32.mrf.mxu0
    %v1510 = vadd.f32 0.0, %v1509
    %1511 = vdwg.mxu0
    %v1512 = vadd.f32 %v1425, %v1450
    %v1513 = vadd.f32 %v1426, %v1470
    %v1514 = vadd.f32 %v1427, %v1490
    %v1515 = vadd.f32 %v1428, %v1510
    %v1516 = vxor.u32 %v1512, 2147483648
    %v1517 = vxor.u32 %v1513, 2147483648
    %v1518 = vxor.u32 %v1514, 2147483648
    %v1519 = vmul.f32 %v1516, 1.442695
    %v1520 = vpow.pop %v1519
    %v1521 = vmul.f32 %v1517, 1.442695
    %v1522 = vpow.pop %v1521
    %v1523 = vmul.f32 %v1518, 1.442695
    %v1524 = vpow.pop %v1523
    %v1525 = vadd.f32 %v1520, 1.0
    %v1526 = vadd.f32 %v1522, 1.0
    %v1527 = vadd.f32 %v1524, 1.0
    %v1528 = vrcp.pop %v1525
    %v1529 = vmul.f32 %v1525, %v1528
    %v1530 = vsub.f32 1.0, %v1529
    %v1531 = vmul.f32 %v1528, %v1530
    %v1532 = vadd.f32 %v1528, %v1531
    %vm1533 = vweird.f32 %v1525
    %vm1534 = vweird.f32 %v1528
    %vm1535 = vmor %vm1533, %vm1534
    %v1536 = vsel %vm1535, %v1528, %v1532
    %v1537 = vand.u32 2147483647, %v1525
    %vm1538 = vcmp.eq.f32.partialorder %v1537, 8.507059e+37
    %v1539 = vand.u32 %v1525, 2147483648
    %v1540 = vor.u32 1.1754944e-38, %v1539
    %v1541 = vsel %vm1538, %v1540, %v1536
    %v1542 = vmul.f32 1.0, %v1541
    %v1543 = vrcp.pop %v1526
    %v1544 = vmul.f32 %v1526, %v1543
    %v1545 = vsub.f32 1.0, %v1544
    %v1546 = vmul.f32 %v1543, %v1545
    %v1547 = vadd.f32 %v1543, %v1546
    %vm1548 = vweird.f32 %v1526
    %vm1549 = vweird.f32 %v1543
    %vm1550 = vmor %vm1548, %vm1549
    %v1551 = vsel %vm1550, %v1543, %v1547
    %v1552 = vand.u32 2147483647, %v1526
    %vm1553 = vcmp.eq.f32.partialorder %v1552, 8.507059e+37
    %v1554 = vand.u32 %v1526, 2147483648
    %v1555 = vor.u32 1.1754944e-38, %v1554
    %v1556 = vsel %vm1553, %v1555, %v1551
    %v1557 = vmul.f32 1.0, %v1556
    %v1558 = vrcp.pop %v1527
    %v1559 = vmul.f32 %v1527, %v1558
    %v1560 = vsub.f32 1.0, %v1559
    %v1561 = vmul.f32 %v1558, %v1560
    %v1562 = vadd.f32 %v1558, %v1561
    %vm1563 = vweird.f32 %v1527
    %vm1564 = vweird.f32 %v1558
    %vm1565 = vmor %vm1563, %vm1564
    %v1566 = vsel %vm1565, %v1558, %v1562
    %v1567 = vand.u32 2147483647, %v1527
    %vm1568 = vcmp.eq.f32.partialorder %v1567, 8.507059e+37
    %v1569 = vand.u32 %v1527, 2147483648
    %v1570 = vor.u32 1.1754944e-38, %v1569
    %v1571 = vsel %vm1568, %v1570, %v1566
    %v1572 = vmul.f32 1.0, %v1571
    %v1573 = vtanh.pop %v1515
    %v1574 = vmul.f32 %v1557, %v1419
    %v1575 = vmul.f32 %v1542, %v1573
    %v1576 = vadd.f32 %v1574, %v1575
    %v1577 = vtanh.pop %v1576
    %v1578 = vmul.f32 %v1572, %v1577
    %v1579 = vperm.slane %v312, 7
    %v1580 = vmul.f32 %v1578, %v1579
    %v1581 = vadd.f32 %v1424, %v1580
    %v1582 = vsel %vm317, %v1581, 0.0
    %1583 = vadd.xlane.f32.xlu0 %v1582
    %v1584 = vpop.xlane.xlu0 %1583
    %v1585 = vld [vmem:[#allocation3] sm:$0x1]
    %v1587 = vperm.slane %v1585, 0
    %v1589 = vadd.f32 %v1584, %v1587
    %vm1590 = vcmask 7168
    %1591 = vst.msk [vmem:[%s6] sm:$0xff] %vm1590, %v1589
    // Predicated region
    $region30: #{tpu_custom_call.1} parent=1 // pred_check
      _
    $region31: #{tpu_custom_call.1} parent=1 // pred_check_branch
      %1593 = sbr.rel (0) target = $region33
    $region32: #{tpu_custom_call.1} parent=1 // pred_region
      _
    $region33: #{tpu_custom_call.1} parent=1 // pred_fallthru
      _
    // Predicated region
    $region34: #{tpu_custom_call.1} parent=1 // pred_check
      _
    $region35: #{tpu_custom_call.1} parent=1 // pred_check_branch
      %1595 = sbr.rel (0) target = $region37
    $region36: #{tpu_custom_call.1} parent=1 // pred_region
      _
    $region37: #{tpu_custom_call.1} parent=1 // pred_fallthru
      _
    %1596 = vsyncpa [#allocation5], 1

</llo_original>
